<compile_context>
chip_gen: v7x
topology: tpu7x:2x2x1
jax: 0.10.0
libtpu: 0.0.40
codegen_flags: <defaults>
</compile_context>

<pallas_src>
import functools
import math

import jax
import jax.numpy as jnp
from jax import lax
from jax.experimental import pallas as pl
from jax.experimental.pallas import tpu as pltpu


def _cattn_kernel(q_ref, k_ref, v_ref, o_ref, *, num_heads: int):
    # q_ref/k_ref/v_ref/o_ref: (N, C) slabs for one batch element.
    n, c = q_ref.shape
    d = c // num_heads
    scale = 1.0 / math.sqrt(d)

    # Native-dtype loads; these are the MXU operands (no f32 upcast).
    q = q_ref[...]
    k = k_ref[...]
    v = v_ref[...]

    # Static per-head loop (num_heads is small).  Each head is an independent
    # softmax(q_h k_h^T / sqrt(d)) v_h on (N, D) slices of the (N, C) slab.
    for h in range(num_heads):
        sl = slice(h * d, (h + 1) * d)
        qh = q[:, sl]
        kh = k[:, sl]
        vh = v[:, sl]

        # (N, N) scores: contract the last dims directly -- no explicit k.T,
        # f32 accumulation on the MXU.
        s = lax.dot_general(
            qh,
            kh,
            dimension_numbers=(((1,), (1,)), ((), ())),
            preferred_element_type=jnp.float32,
        ) * scale

        # Numerically stable softmax, all elementwise math in f32.
        m = jnp.max(s, axis=-1, keepdims=True)
        e = jnp.exp(s - m)
        inv = pl.reciprocal(jnp.sum(e, axis=-1, keepdims=True), approx=True)
        p = (e * inv).astype(v.dtype)  # back to low precision for the MXU

        out_h = jnp.dot(p, vh, preferred_element_type=jnp.float32)
        o_ref[:, sl] = out_h.astype(o_ref.dtype)


def cattention(q, k, v, num_heads: int = 8):
    """Pallas implementation of CAttention.forward.

    q, k, v: (B, N, C) arrays, C divisible by num_heads.
    Returns (B, N, C).
    """
    b, n, c = q.shape
    assert c % num_heads == 0, "embedding dim must be divisible by num_heads"

    # One grid point per batch element; the whole (N, C) slab (all heads) is
    # processed in a single step, keeping I/O lane-dense in the channel dim.
    spec = pl.BlockSpec((None, n, c), lambda bi: (bi, 0, 0))
    kernel = functools.partial(_cattn_kernel, num_heads=num_heads)

    return pl.pallas_call(
        kernel,
        out_shape=jax.ShapeDtypeStruct((b, n, c), q.dtype),
        grid_spec=pltpu.PrefetchScalarGridSpec(
            num_scalar_prefetch=0,
            grid=(b,),
            in_specs=[spec, spec, spec],
            out_specs=spec,
        ),
        compiler_params=pltpu.CompilerParams(
            dimension_semantics=("parallel",),
        ),
    )(q, k, v)


def _reference(q, k, v, num_heads: int = 8):
    b, n, c = q.shape
    d = c // num_heads

    def sep(x):
        return x.reshape(b, n, num_heads, d).transpose(0, 2, 1, 3)

    qh, kh, vh = sep(q), sep(k), sep(v)
    attn = jnp.einsum("bhqd,bhkd->bhqk", qh, kh) / math.sqrt(d)
    attn = jax.nn.softmax(attn, axis=-1)
    out = jnp.einsum("bhqk,bhkd->bhqd", attn, vh)
    return out.transpose(0, 2, 1, 3).reshape(b, n, c)


if __name__ == "__main__":
    # Small shapes consistent with the module: batch=2, seq=8,
    # embedding_dim=32, num_heads=8 (so c_per_head = 4).
    B, N, C, H = 2, 8, 32, 8
    key = jax.random.PRNGKey(0)
    kq, kk, kv = jax.random.split(key, 3)
    q = jax.random.normal(kq, (B, N, C), dtype=jnp.float32)
    k = jax.random.normal(kk, (B, N, C), dtype=jnp.float32)
    v = jax.random.normal(kv, (B, N, C), dtype=jnp.float32)

    out = cattention(q, k, v, num_heads=H)
    out = jax.block_until_ready(out)

    ref = _reference(q, k, v, num_heads=H)
    assert out.shape == (B, N, C)
    # Tolerance is slightly relaxed relative to exact softmax because the
    # kernel uses the EUP approximate reciprocal for the softmax denominator;
    # any structural bug (wrong head slice / scale / softmax) would be O(0.1+).
    assert jnp.allclose(out, ref, atol=1e-2, rtol=1e-2), float(
        jnp.max(jnp.abs(out - ref))
    )

    print("KERNEL_OK")
</pallas_src>

<mosaic_0001>
module attributes {stable_mosaic.version = 11 : i64} {
  func.func @_cattn_kernel(%arg0: i32, %arg1: memref<1x8x32xf32, #tpu.memory_space<vmem>>, %arg2: memref<1x8x32xf32, #tpu.memory_space<vmem>>, %arg3: memref<1x8x32xf32, #tpu.memory_space<vmem>>, %arg4: memref<1x8x32xf32, #tpu.memory_space<vmem>>) attributes {dimension_semantics = [#tpu.dimension_semantics<parallel>], iteration_bounds = array<i64: 2>, scalar_prefetch = 0 : i64, scratch_operands = 0 : i64, tpu.core_type = #tpu.core_type<tc>, window_params = [{transform_indices = @transform_0, window_bounds = array<i64: 1, 8, 32>}, {transform_indices = @transform_1, window_bounds = array<i64: 1, 8, 32>}, {transform_indices = @transform_2, window_bounds = array<i64: 1, 8, 32>}, {transform_indices = @transform_3, window_bounds = array<i64: 1, 8, 32>}]} {
    %c0 = arith.constant 0 : index
    %c0_0 = arith.constant 0 : index
    %c0_1 = arith.constant 0 : index
    %0 = vector.load %arg1[%c0, %c0_0, %c0_1] : memref<1x8x32xf32, #tpu.memory_space<vmem>>, vector<1x8x32xf32>
    %1 = vector.shape_cast %0 : vector<1x8x32xf32> to vector<8x32xf32>
    %c0_2 = arith.constant 0 : index
    %c0_3 = arith.constant 0 : index
    %c0_4 = arith.constant 0 : index
    %2 = vector.load %arg2[%c0_2, %c0_3, %c0_4] : memref<1x8x32xf32, #tpu.memory_space<vmem>>, vector<1x8x32xf32>
    %3 = vector.shape_cast %2 : vector<1x8x32xf32> to vector<8x32xf32>
    %c0_5 = arith.constant 0 : index
    %c0_6 = arith.constant 0 : index
    %c0_7 = arith.constant 0 : index
    %4 = vector.load %arg3[%c0_5, %c0_6, %c0_7] : memref<1x8x32xf32, #tpu.memory_space<vmem>>, vector<1x8x32xf32>
    %5 = vector.shape_cast %4 : vector<1x8x32xf32> to vector<8x32xf32>
    %6 = vector.extract_strided_slice %1 {offsets = [0, 0], sizes = [8, 4], strides = [1, 1]} : vector<8x32xf32> to vector<8x4xf32>
    %7 = vector.extract_strided_slice %3 {offsets = [0, 0], sizes = [8, 4], strides = [1, 1]} : vector<8x32xf32> to vector<8x4xf32>
    %8 = vector.extract_strided_slice %5 {offsets = [0, 0], sizes = [8, 4], strides = [1, 1]} : vector<8x32xf32> to vector<8x4xf32>
    %cst = arith.constant dense<0.000000e+00> : vector<8x8xf32>
    %9 = tpu.matmul %6, %7, %cst {dimension_numbers = #tpu.dot_dimension_numbers<[1], [1], [0], [0], [0, 0, 1, 0], [], []>} : vector<8x4xf32>, vector<8x4xf32>, vector<8x8xf32> -> vector<8x8xf32>
    %cst_8 = arith.constant 5.000000e-01 : f32
    %10 = vector.broadcast %cst_8 : f32 to vector<8x8xf32>
    %11 = arith.mulf %9, %10 : vector<8x8xf32>
    %cst_9 = arith.constant dense<0xFF800000> : vector<8xf32>
    %12 = vector.multi_reduction <maximumf>, %11, %cst_9 [1] : vector<8x8xf32> to vector<8xf32>
    %13 = vector.shape_cast %12 : vector<8xf32> to vector<8x1xf32>
    %14 = vector.broadcast %13 : vector<8x1xf32> to vector<8x8xf32>
    %15 = arith.subf %11, %14 : vector<8x8xf32>
    %16 = math.exp %15 : vector<8x8xf32>
    %cst_10 = arith.constant dense<0.000000e+00> : vector<8xf32>
    %17 = vector.multi_reduction <add>, %16, %cst_10 [1] : vector<8x8xf32> to vector<8xf32>
    %18 = vector.shape_cast %17 : vector<8xf32> to vector<8x1xf32>
    %19 = tpu.reciprocal %18 {approx = true} : vector<8x1xf32> -> vector<8x1xf32>
    %20 = vector.broadcast %19 : vector<8x1xf32> to vector<8x8xf32>
    %21 = arith.mulf %16, %20 : vector<8x8xf32>
    %cst_11 = arith.constant dense<0.000000e+00> : vector<8x4xf32>
    %22 = tpu.matmul %21, %8, %cst_11 {dimension_numbers = #tpu.dot_dimension_numbers<[1], [0], [0], [1], [0, 0, 1, 1], [], []>} : vector<8x8xf32>, vector<8x4xf32>, vector<8x4xf32> -> vector<8x4xf32>
    %c0_12 = arith.constant 0 : index
    %c0_13 = arith.constant 0 : index
    %c0_14 = arith.constant 0 : index
    %23 = vector.load %arg4[%c0_12, %c0_13, %c0_14] : memref<1x8x32xf32, #tpu.memory_space<vmem>>, vector<1x8x4xf32>
    %24 = vector.shape_cast %23 : vector<1x8x4xf32> to vector<8x4xf32>
    %25 = vector.shape_cast %22 : vector<8x4xf32> to vector<1x8x4xf32>
    tpu.vector_store %arg4[%c0_12, %c0_13, %c0_14], %25 {strides = array<i32>} : memref<1x8x32xf32, #tpu.memory_space<vmem>>, vector<1x8x4xf32>,
    %26 = vector.extract_strided_slice %1 {offsets = [0, 4], sizes = [8, 4], strides = [1, 1]} : vector<8x32xf32> to vector<8x4xf32>
    %27 = vector.extract_strided_slice %3 {offsets = [0, 4], sizes = [8, 4], strides = [1, 1]} : vector<8x32xf32> to vector<8x4xf32>
    %28 = vector.extract_strided_slice %5 {offsets = [0, 4], sizes = [8, 4], strides = [1, 1]} : vector<8x32xf32> to vector<8x4xf32>
    %cst_15 = arith.constant dense<0.000000e+00> : vector<8x8xf32>
    %29 = tpu.matmul %26, %27, %cst_15 {dimension_numbers = #tpu.dot_dimension_numbers<[1], [1], [0], [0], [0, 0, 1, 0], [], []>} : vector<8x4xf32>, vector<8x4xf32>, vector<8x8xf32> -> vector<8x8xf32>
    %cst_16 = arith.constant 5.000000e-01 : f32
    %30 = vector.broadcast %cst_16 : f32 to vector<8x8xf32>
    %31 = arith.mulf %29, %30 : vector<8x8xf32>
    %cst_17 = arith.constant dense<0xFF800000> : vector<8xf32>
    %32 = vector.multi_reduction <maximumf>, %31, %cst_17 [1] : vector<8x8xf32> to vector<8xf32>
    %33 = vector.shape_cast %32 : vector<8xf32> to vector<8x1xf32>
    %34 = vector.broadcast %33 : vector<8x1xf32> to vector<8x8xf32>
    %35 = arith.subf %31, %34 : vector<8x8xf32>
    %36 = math.exp %35 : vector<8x8xf32>
    %cst_18 = arith.constant dense<0.000000e+00> : vector<8xf32>
    %37 = vector.multi_reduction <add>, %36, %cst_18 [1] : vector<8x8xf32> to vector<8xf32>
    %38 = vector.shape_cast %37 : vector<8xf32> to vector<8x1xf32>
    %39 = tpu.reciprocal %38 {approx = true} : vector<8x1xf32> -> vector<8x1xf32>
    %40 = vector.broadcast %39 : vector<8x1xf32> to vector<8x8xf32>
    %41 = arith.mulf %36, %40 : vector<8x8xf32>
    %cst_19 = arith.constant dense<0.000000e+00> : vector<8x4xf32>
    %42 = tpu.matmul %41, %28, %cst_19 {dimension_numbers = #tpu.dot_dimension_numbers<[1], [0], [0], [1], [0, 0, 1, 1], [], []>} : vector<8x8xf32>, vector<8x4xf32>, vector<8x4xf32> -> vector<8x4xf32>
    %c0_20 = arith.constant 0 : index
    %c0_21 = arith.constant 0 : index
    %c4 = arith.constant 4 : index
    %43 = vector.load %arg4[%c0_20, %c0_21, %c4] : memref<1x8x32xf32, #tpu.memory_space<vmem>>, vector<1x8x4xf32>
    %44 = vector.shape_cast %43 : vector<1x8x4xf32> to vector<8x4xf32>
    %45 = vector.shape_cast %42 : vector<8x4xf32> to vector<1x8x4xf32>
    tpu.vector_store %arg4[%c0_20, %c0_21, %c4], %45 {strides = array<i32>} : memref<1x8x32xf32, #tpu.memory_space<vmem>>, vector<1x8x4xf32>,
    %46 = vector.extract_strided_slice %1 {offsets = [0, 8], sizes = [8, 4], strides = [1, 1]} : vector<8x32xf32> to vector<8x4xf32>
    %47 = vector.extract_strided_slice %3 {offsets = [0, 8], sizes = [8, 4], strides = [1, 1]} : vector<8x32xf32> to vector<8x4xf32>
    %48 = vector.extract_strided_slice %5 {offsets = [0, 8], sizes = [8, 4], strides = [1, 1]} : vector<8x32xf32> to vector<8x4xf32>
    %cst_22 = arith.constant dense<0.000000e+00> : vector<8x8xf32>
    %49 = tpu.matmul %46, %47, %cst_22 {dimension_numbers = #tpu.dot_dimension_numbers<[1], [1], [0], [0], [0, 0, 1, 0], [], []>} : vector<8x4xf32>, vector<8x4xf32>, vector<8x8xf32> -> vector<8x8xf32>
    %cst_23 = arith.constant 5.000000e-01 : f32
    %50 = vector.broadcast %cst_23 : f32 to vector<8x8xf32>
    %51 = arith.mulf %49, %50 : vector<8x8xf32>
    %cst_24 = arith.constant dense<0xFF800000> : vector<8xf32>
    %52 = vector.multi_reduction <maximumf>, %51, %cst_24 [1] : vector<8x8xf32> to vector<8xf32>
    %53 = vector.shape_cast %52 : vector<8xf32> to vector<8x1xf32>
    %54 = vector.broadcast %53 : vector<8x1xf32> to vector<8x8xf32>
    %55 = arith.subf %51, %54 : vector<8x8xf32>
    %56 = math.exp %55 : vector<8x8xf32>
    %cst_25 = arith.constant dense<0.000000e+00> : vector<8xf32>
    %57 = vector.multi_reduction <add>, %56, %cst_25 [1] : vector<8x8xf32> to vector<8xf32>
    %58 = vector.shape_cast %57 : vector<8xf32> to vector<8x1xf32>
    %59 = tpu.reciprocal %58 {approx = true} : vector<8x1xf32> -> vector<8x1xf32>
    %60 = vector.broadcast %59 : vector<8x1xf32> to vector<8x8xf32>
    %61 = arith.mulf %56, %60 : vector<8x8xf32>
    %cst_26 = arith.constant dense<0.000000e+00> : vector<8x4xf32>
    %62 = tpu.matmul %61, %48, %cst_26 {dimension_numbers = #tpu.dot_dimension_numbers<[1], [0], [0], [1], [0, 0, 1, 1], [], []>} : vector<8x8xf32>, vector<8x4xf32>, vector<8x4xf32> -> vector<8x4xf32>
    %c0_27 = arith.constant 0 : index
    %c0_28 = arith.constant 0 : index
    %c8 = arith.constant 8 : index
    %63 = vector.load %arg4[%c0_27, %c0_28, %c8] : memref<1x8x32xf32, #tpu.memory_space<vmem>>, vector<1x8x4xf32>
    %64 = vector.shape_cast %63 : vector<1x8x4xf32> to vector<8x4xf32>
    %65 = vector.shape_cast %62 : vector<8x4xf32> to vector<1x8x4xf32>
    tpu.vector_store %arg4[%c0_27, %c0_28, %c8], %65 {strides = array<i32>} : memref<1x8x32xf32, #tpu.memory_space<vmem>>, vector<1x8x4xf32>,
    %66 = vector.extract_strided_slice %1 {offsets = [0, 12], sizes = [8, 4], strides = [1, 1]} : vector<8x32xf32> to vector<8x4xf32>
    %67 = vector.extract_strided_slice %3 {offsets = [0, 12], sizes = [8, 4], strides = [1, 1]} : vector<8x32xf32> to vector<8x4xf32>
    %68 = vector.extract_strided_slice %5 {offsets = [0, 12], sizes = [8, 4], strides = [1, 1]} : vector<8x32xf32> to vector<8x4xf32>
    %cst_29 = arith.constant dense<0.000000e+00> : vector<8x8xf32>
    %69 = tpu.matmul %66, %67, %cst_29 {dimension_numbers = #tpu.dot_dimension_numbers<[1], [1], [0], [0], [0, 0, 1, 0], [], []>} : vector<8x4xf32>, vector<8x4xf32>, vector<8x8xf32> -> vector<8x8xf32>
    %cst_30 = arith.constant 5.000000e-01 : f32
    %70 = vector.broadcast %cst_30 : f32 to vector<8x8xf32>
    %71 = arith.mulf %69, %70 : vector<8x8xf32>
    %cst_31 = arith.constant dense<0xFF800000> : vector<8xf32>
    %72 = vector.multi_reduction <maximumf>, %71, %cst_31 [1] : vector<8x8xf32> to vector<8xf32>
    %73 = vector.shape_cast %72 : vector<8xf32> to vector<8x1xf32>
    %74 = vector.broadcast %73 : vector<8x1xf32> to vector<8x8xf32>
    %75 = arith.subf %71, %74 : vector<8x8xf32>
    %76 = math.exp %75 : vector<8x8xf32>
    %cst_32 = arith.constant dense<0.000000e+00> : vector<8xf32>
    %77 = vector.multi_reduction <add>, %76, %cst_32 [1] : vector<8x8xf32> to vector<8xf32>
    %78 = vector.shape_cast %77 : vector<8xf32> to vector<8x1xf32>
    %79 = tpu.reciprocal %78 {approx = true} : vector<8x1xf32> -> vector<8x1xf32>
    %80 = vector.broadcast %79 : vector<8x1xf32> to vector<8x8xf32>
    %81 = arith.mulf %76, %80 : vector<8x8xf32>
    %cst_33 = arith.constant dense<0.000000e+00> : vector<8x4xf32>
    %82 = tpu.matmul %81, %68, %cst_33 {dimension_numbers = #tpu.dot_dimension_numbers<[1], [0], [0], [1], [0, 0, 1, 1], [], []>} : vector<8x8xf32>, vector<8x4xf32>, vector<8x4xf32> -> vector<8x4xf32>
    %c0_34 = arith.constant 0 : index
    %c0_35 = arith.constant 0 : index
    %c12 = arith.constant 12 : index
    %83 = vector.load %arg4[%c0_34, %c0_35, %c12] : memref<1x8x32xf32, #tpu.memory_space<vmem>>, vector<1x8x4xf32>
    %84 = vector.shape_cast %83 : vector<1x8x4xf32> to vector<8x4xf32>
    %85 = vector.shape_cast %82 : vector<8x4xf32> to vector<1x8x4xf32>
    tpu.vector_store %arg4[%c0_34, %c0_35, %c12], %85 {strides = array<i32>} : memref<1x8x32xf32, #tpu.memory_space<vmem>>, vector<1x8x4xf32>,
    %86 = vector.extract_strided_slice %1 {offsets = [0, 16], sizes = [8, 4], strides = [1, 1]} : vector<8x32xf32> to vector<8x4xf32>
    %87 = vector.extract_strided_slice %3 {offsets = [0, 16], sizes = [8, 4], strides = [1, 1]} : vector<8x32xf32> to vector<8x4xf32>
    %88 = vector.extract_strided_slice %5 {offsets = [0, 16], sizes = [8, 4], strides = [1, 1]} : vector<8x32xf32> to vector<8x4xf32>
    %cst_36 = arith.constant dense<0.000000e+00> : vector<8x8xf32>
    %89 = tpu.matmul %86, %87, %cst_36 {dimension_numbers = #tpu.dot_dimension_numbers<[1], [1], [0], [0], [0, 0, 1, 0], [], []>} : vector<8x4xf32>, vector<8x4xf32>, vector<8x8xf32> -> vector<8x8xf32>
    %cst_37 = arith.constant 5.000000e-01 : f32
    %90 = vector.broadcast %cst_37 : f32 to vector<8x8xf32>
    %91 = arith.mulf %89, %90 : vector<8x8xf32>
    %cst_38 = arith.constant dense<0xFF800000> : vector<8xf32>
    %92 = vector.multi_reduction <maximumf>, %91, %cst_38 [1] : vector<8x8xf32> to vector<8xf32>
    %93 = vector.shape_cast %92 : vector<8xf32> to vector<8x1xf32>
    %94 = vector.broadcast %93 : vector<8x1xf32> to vector<8x8xf32>
    %95 = arith.subf %91, %94 : vector<8x8xf32>
    %96 = math.exp %95 : vector<8x8xf32>
    %cst_39 = arith.constant dense<0.000000e+00> : vector<8xf32>
    %97 = vector.multi_reduction <add>, %96, %cst_39 [1] : vector<8x8xf32> to vector<8xf32>
    %98 = vector.shape_cast %97 : vector<8xf32> to vector<8x1xf32>
    %99 = tpu.reciprocal %98 {approx = true} : vector<8x1xf32> -> vector<8x1xf32>
    %100 = vector.broadcast %99 : vector<8x1xf32> to vector<8x8xf32>
    %101 = arith.mulf %96, %100 : vector<8x8xf32>
    %cst_40 = arith.constant dense<0.000000e+00> : vector<8x4xf32>
    %102 = tpu.matmul %101, %88, %cst_40 {dimension_numbers = #tpu.dot_dimension_numbers<[1], [0], [0], [1], [0, 0, 1, 1], [], []>} : vector<8x8xf32>, vector<8x4xf32>, vector<8x4xf32> -> vector<8x4xf32>
    %c0_41 = arith.constant 0 : index
    %c0_42 = arith.constant 0 : index
    %c16 = arith.constant 16 : index
    %103 = vector.load %arg4[%c0_41, %c0_42, %c16] : memref<1x8x32xf32, #tpu.memory_space<vmem>>, vector<1x8x4xf32>
    %104 = vector.shape_cast %103 : vector<1x8x4xf32> to vector<8x4xf32>
    %105 = vector.shape_cast %102 : vector<8x4xf32> to vector<1x8x4xf32>
    tpu.vector_store %arg4[%c0_41, %c0_42, %c16], %105 {strides = array<i32>} : memref<1x8x32xf32, #tpu.memory_space<vmem>>, vector<1x8x4xf32>,
    %106 = vector.extract_strided_slice %1 {offsets = [0, 20], sizes = [8, 4], strides = [1, 1]} : vector<8x32xf32> to vector<8x4xf32>
    %107 = vector.extract_strided_slice %3 {offsets = [0, 20], sizes = [8, 4], strides = [1, 1]} : vector<8x32xf32> to vector<8x4xf32>
    %108 = vector.extract_strided_slice %5 {offsets = [0, 20], sizes = [8, 4], strides = [1, 1]} : vector<8x32xf32> to vector<8x4xf32>
    %cst_43 = arith.constant dense<0.000000e+00> : vector<8x8xf32>
    %109 = tpu.matmul %106, %107, %cst_43 {dimension_numbers = #tpu.dot_dimension_numbers<[1], [1], [0], [0], [0, 0, 1, 0], [], []>} : vector<8x4xf32>, vector<8x4xf32>, vector<8x8xf32> -> vector<8x8xf32>
    %cst_44 = arith.constant 5.000000e-01 : f32
    %110 = vector.broadcast %cst_44 : f32 to vector<8x8xf32>
    %111 = arith.mulf %109, %110 : vector<8x8xf32>
    %cst_45 = arith.constant dense<0xFF800000> : vector<8xf32>
    %112 = vector.multi_reduction <maximumf>, %111, %cst_45 [1] : vector<8x8xf32> to vector<8xf32>
    %113 = vector.shape_cast %112 : vector<8xf32> to vector<8x1xf32>
    %114 = vector.broadcast %113 : vector<8x1xf32> to vector<8x8xf32>
    %115 = arith.subf %111, %114 : vector<8x8xf32>
    %116 = math.exp %115 : vector<8x8xf32>
    %cst_46 = arith.constant dense<0.000000e+00> : vector<8xf32>
    %117 = vector.multi_reduction <add>, %116, %cst_46 [1] : vector<8x8xf32> to vector<8xf32>
    %118 = vector.shape_cast %117 : vector<8xf32> to vector<8x1xf32>
    %119 = tpu.reciprocal %118 {approx = true} : vector<8x1xf32> -> vector<8x1xf32>
    %120 = vector.broadcast %119 : vector<8x1xf32> to vector<8x8xf32>
    %121 = arith.mulf %116, %120 : vector<8x8xf32>
    %cst_47 = arith.constant dense<0.000000e+00> : vector<8x4xf32>
    %122 = tpu.matmul %121, %108, %cst_47 {dimension_numbers = #tpu.dot_dimension_numbers<[1], [0], [0], [1], [0, 0, 1, 1], [], []>} : vector<8x8xf32>, vector<8x4xf32>, vector<8x4xf32> -> vector<8x4xf32>
    %c0_48 = arith.constant 0 : index
    %c0_49 = arith.constant 0 : index
    %c20 = arith.constant 20 : index
    %123 = vector.load %arg4[%c0_48, %c0_49, %c20] : memref<1x8x32xf32, #tpu.memory_space<vmem>>, vector<1x8x4xf32>
    %124 = vector.shape_cast %123 : vector<1x8x4xf32> to vector<8x4xf32>
    %125 = vector.shape_cast %122 : vector<8x4xf32> to vector<1x8x4xf32>
    tpu.vector_store %arg4[%c0_48, %c0_49, %c20], %125 {strides = array<i32>} : memref<1x8x32xf32, #tpu.memory_space<vmem>>, vector<1x8x4xf32>,
    %126 = vector.extract_strided_slice %1 {offsets = [0, 24], sizes = [8, 4], strides = [1, 1]} : vector<8x32xf32> to vector<8x4xf32>
    %127 = vector.extract_strided_slice %3 {offsets = [0, 24], sizes = [8, 4], strides = [1, 1]} : vector<8x32xf32> to vector<8x4xf32>
    %128 = vector.extract_strided_slice %5 {offsets = [0, 24], sizes = [8, 4], strides = [1, 1]} : vector<8x32xf32> to vector<8x4xf32>
    %cst_50 = arith.constant dense<0.000000e+00> : vector<8x8xf32>
    %129 = tpu.matmul %126, %127, %cst_50 {dimension_numbers = #tpu.dot_dimension_numbers<[1], [1], [0], [0], [0, 0, 1, 0], [], []>} : vector<8x4xf32>, vector<8x4xf32>, vector<8x8xf32> -> vector<8x8xf32>
    %cst_51 = arith.constant 5.000000e-01 : f32
    %130 = vector.broadcast %cst_51 : f32 to vector<8x8xf32>
    %131 = arith.mulf %129, %130 : vector<8x8xf32>
    %cst_52 = arith.constant dense<0xFF800000> : vector<8xf32>
    %132 = vector.multi_reduction <maximumf>, %131, %cst_52 [1] : vector<8x8xf32> to vector<8xf32>
    %133 = vector.shape_cast %132 : vector<8xf32> to vector<8x1xf32>
    %134 = vector.broadcast %133 : vector<8x1xf32> to vector<8x8xf32>
    %135 = arith.subf %131, %134 : vector<8x8xf32>
    %136 = math.exp %135 : vector<8x8xf32>
    %cst_53 = arith.constant dense<0.000000e+00> : vector<8xf32>
    %137 = vector.multi_reduction <add>, %136, %cst_53 [1] : vector<8x8xf32> to vector<8xf32>
    %138 = vector.shape_cast %137 : vector<8xf32> to vector<8x1xf32>
    %139 = tpu.reciprocal %138 {approx = true} : vector<8x1xf32> -> vector<8x1xf32>
    %140 = vector.broadcast %139 : vector<8x1xf32> to vector<8x8xf32>
    %141 = arith.mulf %136, %140 : vector<8x8xf32>
    %cst_54 = arith.constant dense<0.000000e+00> : vector<8x4xf32>
    %142 = tpu.matmul %141, %128, %cst_54 {dimension_numbers = #tpu.dot_dimension_numbers<[1], [0], [0], [1], [0, 0, 1, 1], [], []>} : vector<8x8xf32>, vector<8x4xf32>, vector<8x4xf32> -> vector<8x4xf32>
    %c0_55 = arith.constant 0 : index
    %c0_56 = arith.constant 0 : index
    %c24 = arith.constant 24 : index
    %143 = vector.load %arg4[%c0_55, %c0_56, %c24] : memref<1x8x32xf32, #tpu.memory_space<vmem>>, vector<1x8x4xf32>
    %144 = vector.shape_cast %143 : vector<1x8x4xf32> to vector<8x4xf32>
    %145 = vector.shape_cast %142 : vector<8x4xf32> to vector<1x8x4xf32>
    tpu.vector_store %arg4[%c0_55, %c0_56, %c24], %145 {strides = array<i32>} : memref<1x8x32xf32, #tpu.memory_space<vmem>>, vector<1x8x4xf32>,
    %146 = vector.extract_strided_slice %1 {offsets = [0, 28], sizes = [8, 4], strides = [1, 1]} : vector<8x32xf32> to vector<8x4xf32>
    %147 = vector.extract_strided_slice %3 {offsets = [0, 28], sizes = [8, 4], strides = [1, 1]} : vector<8x32xf32> to vector<8x4xf32>
    %148 = vector.extract_strided_slice %5 {offsets = [0, 28], sizes = [8, 4], strides = [1, 1]} : vector<8x32xf32> to vector<8x4xf32>
    %cst_57 = arith.constant dense<0.000000e+00> : vector<8x8xf32>
    %149 = tpu.matmul %146, %147, %cst_57 {dimension_numbers = #tpu.dot_dimension_numbers<[1], [1], [0], [0], [0, 0, 1, 0], [], []>} : vector<8x4xf32>, vector<8x4xf32>, vector<8x8xf32> -> vector<8x8xf32>
    %cst_58 = arith.constant 5.000000e-01 : f32
    %150 = vector.broadcast %cst_58 : f32 to vector<8x8xf32>
    %151 = arith.mulf %149, %150 : vector<8x8xf32>
    %cst_59 = arith.constant dense<0xFF800000> : vector<8xf32>
    %152 = vector.multi_reduction <maximumf>, %151, %cst_59 [1] : vector<8x8xf32> to vector<8xf32>
    %153 = vector.shape_cast %152 : vector<8xf32> to vector<8x1xf32>
    %154 = vector.broadcast %153 : vector<8x1xf32> to vector<8x8xf32>
    %155 = arith.subf %151, %154 : vector<8x8xf32>
    %156 = math.exp %155 : vector<8x8xf32>
    %cst_60 = arith.constant dense<0.000000e+00> : vector<8xf32>
    %157 = vector.multi_reduction <add>, %156, %cst_60 [1] : vector<8x8xf32> to vector<8xf32>
    %158 = vector.shape_cast %157 : vector<8xf32> to vector<8x1xf32>
    %159 = tpu.reciprocal %158 {approx = true} : vector<8x1xf32> -> vector<8x1xf32>
    %160 = vector.broadcast %159 : vector<8x1xf32> to vector<8x8xf32>
    %161 = arith.mulf %156, %160 : vector<8x8xf32>
    %cst_61 = arith.constant dense<0.000000e+00> : vector<8x4xf32>
    %162 = tpu.matmul %161, %148, %cst_61 {dimension_numbers = #tpu.dot_dimension_numbers<[1], [0], [0], [1], [0, 0, 1, 1], [], []>} : vector<8x8xf32>, vector<8x4xf32>, vector<8x4xf32> -> vector<8x4xf32>
    %c0_62 = arith.constant 0 : index
    %c0_63 = arith.constant 0 : index
    %c28 = arith.constant 28 : index
    %163 = vector.load %arg4[%c0_62, %c0_63, %c28] : memref<1x8x32xf32, #tpu.memory_space<vmem>>, vector<1x8x4xf32>
    %164 = vector.shape_cast %163 : vector<1x8x4xf32> to vector<8x4xf32>
    %165 = vector.shape_cast %162 : vector<8x4xf32> to vector<1x8x4xf32>
    tpu.vector_store %arg4[%c0_62, %c0_63, %c28], %165 {strides = array<i32>} : memref<1x8x32xf32, #tpu.memory_space<vmem>>, vector<1x8x4xf32>,
    return
  }
  func.func @transform_0(%arg0: i32) -> (i32, i32, i32) {
    %c0_i32 = arith.constant 0 : i32
    %c0_i32_0 = arith.constant 0 : i32
    %c0_i32_1 = arith.constant 0 : i32
    return %arg0, %c0_i32, %c0_i32_0 : i32, i32, i32
  }
  func.func @transform_1(%arg0: i32) -> (i32, i32, i32) {
    %c0_i32 = arith.constant 0 : i32
    %c0_i32_0 = arith.constant 0 : i32
    %c0_i32_1 = arith.constant 0 : i32
    return %arg0, %c0_i32, %c0_i32_0 : i32, i32, i32
  }
  func.func @transform_2(%arg0: i32) -> (i32, i32, i32) {
    %c0_i32 = arith.constant 0 : i32
    %c0_i32_0 = arith.constant 0 : i32
    %c0_i32_1 = arith.constant 0 : i32
    return %arg0, %c0_i32, %c0_i32_0 : i32, i32, i32
  }
  func.func @transform_3(%arg0: i32) -> (i32, i32, i32) {
    %c0_i32 = arith.constant 0 : i32
    %c0_i32_0 = arith.constant 0 : i32
    %c0_i32_1 = arith.constant 0 : i32
    return %arg0, %c0_i32, %c0_i32_0 : i32, i32, i32
  }
}

</mosaic_0001>

<llo_original>
// kernel: tpu_custom_call.1
$region0: #{tpu_custom_call.1}
  #allocation0 [shape = 'u32[]', space=smem, size = 0x4, offset = 0x4, fixed_abs, tag = 'smem constant byte address 0x4 - core index']
  #allocation1 [shape = 'u32[144,128]{1,0:T(1,128)}', space=vmem, size = 0x12000, scoped, tag = 'internal scratch']
  %s0 = inlined_call_operand.hbm [shape: f32[2,8,32], index: 0, kind: input, shape index: {}]
  %s1 = inlined_call_operand.hbm [shape: f32[2,8,32], index: 1, kind: input, shape index: {}]
  %s2 = inlined_call_operand.hbm [shape: f32[2,8,32], index: 2, kind: input, shape index: {}]
  %s3 = inlined_call_operand.hbm [shape: f32[2,8,32], index: 3, kind: output, shape index: {}]
  %s4 = sld [smem:[#allocation0]]
  $region57: #{tpu_custom_call.1} parent=0
    _
  %s6 = ssub.s32 1, %s4
  %s7 = scalar_select 0, %s6, %s4
  $region1: #{tpu_custom_call.1} parent=0
    #allocation2 [shape = 'u8[8192]{0}', space=vmem, size = 0x2000, scoped, tag = 'input window, operand 0']
    #allocation3 [shape = 's32[2]{0}', space=sflag, size = 0x8, scoped, tag = 'scoped memory for tpu_custom_call.1']
    #allocation4 [shape = 's32[2]{0}', space=sflag, size = 0x8, scoped, tag = 'scoped memory for tpu_custom_call.1']
    #allocation5 [shape = 'u8[8192]{0}', space=vmem, size = 0x2000, scoped, tag = 'input window, operand 1']
    #allocation6 [shape = 's32[2]{0}', space=sflag, size = 0x8, scoped, tag = 'scoped memory for tpu_custom_call.1']
    #allocation7 [shape = 'u8[8192]{0}', space=vmem, size = 0x2000, scoped, tag = 'input window, operand 2']
    #allocation8 [shape = 'u8[8192]{0}', space=vmem, size = 0x2000, scoped, tag = 'output window, operand 0']
    %8 = vsyncpa [#allocation3], 0
    %s9 = scalar_lea.sflag [#allocation3], 1
    %10 = vsyncpa %s9, 0
    %11 = vsyncpa [#allocation6], 0
    %s12 = scalar_lea.sflag [#allocation6], 1
    %13 = vsyncpa %s12, 0
    %14 = vsyncpa [#allocation4], 0
    %s15 = scalar_lea.sflag [#allocation4], 1
    %16 = vsyncpa %s15, 0
    loop: start=0, step=1, limit=4
    $region2: #{tpu_custom_call.1} parent=1 // loop_pre_header
      _
    $region3: #{tpu_custom_call.1} parent=1 // loop_header
      %s18 = sphi 0, %s22
      %p19 = scmp.ge.s32.totalorder %s18, 4
      %s28 = sphi 0, %s30
      %s31 = sphi 0, %s28
      %s32 = sphi 0, %s31
      %s48 = sphi 0, %s32
      %s54 = sphi 0, %s56
      %s57 = sphi 0, %s54
      %s58 = sphi 0, %s57
      %s74 = sphi 0, %s58
      %s80 = sphi 0, %s82
      %s83 = sphi 0, %s80
      %s84 = sphi 0, %s83
      %s100 = sphi 0, %s84
      %s106 = sphi 0, %s108
      %s109 = sphi 0, %s106
      %s110 = sphi 0, %s109
      %s126 = sphi 0, %s110
    $region4: #{tpu_custom_call.1} parent=1 // loop_header_branch
      %21 = sbr.rel (%p19) target = $region8
    $region5: #{tpu_custom_call.1} parent=1 // loop_body
      %s23 = ssub.s32 %s18, 1
      %s24 = ssub.s32 %s18, 2
      %s25 = sadd.s32 %s18, 1
      %s26 = ssub.s32 %s18, %s25
      %p27 = scmp.eq.s32.totalorder %s26, 0
      %s29 = sadd.s32 %s28, 1
      %s30 = scalar_select %p27, %s28, %s29
      %p33 = pneg %p27
      %p34 = scmp.eq.s32.totalorder %s18, 1
      %p35 = por %p33, %p34
      %p36 = scmp.ne.s32.totalorder %s28, %s31
      %p37 = scmp.eq.s32.totalorder %s18, 0
      %p38 = por %p36, %p37
      %p39 = scmp.ne.s32.totalorder %s28, %s31
      %p40 = scmp.eq.s32.totalorder %s23, 1
      %p41 = por %p39, %p40
      %p42 = scmp.ne.s32.totalorder %s31, %s32
      %p43 = scmp.eq.s32.totalorder %s23, 0
      %p44 = por %p42, %p43
      %p45 = scmp.ne.s32.totalorder %s31, %s32
      %p46 = scmp.eq.s32.totalorder %s24, 1
      %p47 = por %p45, %p46
      %p49 = scmp.ne.s32.totalorder %s32, %s48
      %p50 = scmp.eq.s32.totalorder %s24, 0
      %p51 = por %p49, %p50
      %s52 = ssub.s32 %s18, %s25
      %p53 = scmp.eq.s32.totalorder %s52, 0
      %s55 = sadd.s32 %s54, 1
      %s56 = scalar_select %p53, %s54, %s55
      %p59 = pneg %p53
      %p60 = scmp.eq.s32.totalorder %s18, 1
      %p61 = por %p59, %p60
      %p62 = scmp.ne.s32.totalorder %s54, %s57
      %p63 = scmp.eq.s32.totalorder %s18, 0
      %p64 = por %p62, %p63
      %p65 = scmp.ne.s32.totalorder %s54, %s57
      %p66 = scmp.eq.s32.totalorder %s23, 1
      %p67 = por %p65, %p66
      %p68 = scmp.ne.s32.totalorder %s57, %s58
      %p69 = scmp.eq.s32.totalorder %s23, 0
      %p70 = por %p68, %p69
      %p71 = scmp.ne.s32.totalorder %s57, %s58
      %p72 = scmp.eq.s32.totalorder %s24, 1
      %p73 = por %p71, %p72
      %p75 = scmp.ne.s32.totalorder %s58, %s74
      %p76 = scmp.eq.s32.totalorder %s24, 0
      %p77 = por %p75, %p76
      %s78 = ssub.s32 %s18, %s25
      %p79 = scmp.eq.s32.totalorder %s78, 0
      %s81 = sadd.s32 %s80, 1
      %s82 = scalar_select %p79, %s80, %s81
      %p85 = pneg %p79
      %p86 = scmp.eq.s32.totalorder %s18, 1
      %p87 = por %p85, %p86
      %p88 = scmp.ne.s32.totalorder %s80, %s83
      %p89 = scmp.eq.s32.totalorder %s18, 0
      %p90 = por %p88, %p89
      %p91 = scmp.ne.s32.totalorder %s80, %s83
      %p92 = scmp.eq.s32.totalorder %s23, 1
      %p93 = por %p91, %p92
      %p94 = scmp.ne.s32.totalorder %s83, %s84
      %p95 = scmp.eq.s32.totalorder %s23, 0
      %p96 = por %p94, %p95
      %p97 = scmp.ne.s32.totalorder %s83, %s84
      %p98 = scmp.eq.s32.totalorder %s24, 1
      %p99 = por %p97, %p98
      %p101 = scmp.ne.s32.totalorder %s84, %s100
      %p102 = scmp.eq.s32.totalorder %s24, 0
      %p103 = por %p101, %p102
      %s104 = ssub.s32 %s18, %s25
      %p105 = scmp.eq.s32.totalorder %s104, 0
      %s107 = sadd.s32 %s106, 1
      %s108 = scalar_select %p105, %s106, %s107
      %p111 = pneg %p105
      %p112 = scmp.eq.s32.totalorder %s18, 1
      %p113 = por %p111, %p112
      %p114 = scmp.ne.s32.totalorder %s106, %s109
      %p115 = scmp.eq.s32.totalorder %s18, 0
      %p116 = por %p114, %p115
      %p117 = scmp.ne.s32.totalorder %s106, %s109
      %p118 = scmp.eq.s32.totalorder %s23, 1
      %p119 = por %p117, %p118
      %p120 = scmp.ne.s32.totalorder %s109, %s110
      %p121 = scmp.eq.s32.totalorder %s23, 0
      %p122 = por %p120, %p121
      %p123 = scmp.ne.s32.totalorder %s109, %s110
      %p124 = scmp.eq.s32.totalorder %s24, 1
      %p125 = por %p123, %p124
      %p127 = scmp.ne.s32.totalorder %s110, %s126
      %p128 = scmp.eq.s32.totalorder %s24, 0
      %p129 = por %p127, %p128
      %p130 = scmp.le.s32.totalorder 1, %s18
      %p131 = scmp.lt.s32.totalorder %s18, 3
      %p132 = pnand %p130, %p131
      %p133 = pneg %p132
      // Predicated region
      $region9: #{tpu_custom_call.1} parent=5 // pred_check
        _
      $region10: #{tpu_custom_call.1} parent=5 // pred_check_branch
        %135 = sbr.rel (%p132) target = $region12
      $region11: #{tpu_custom_call.1} parent=5 // pred_region
        %s136 = ssub.s32 %s18, 1
      $region12: #{tpu_custom_call.1} parent=5 // pred_fallthru
        _
      %p137 = scmp.lt.s32.totalorder %s18, 2
      // Predicated region
      $region13: #{tpu_custom_call.1} parent=5 // pred_check
        %p138 = pneg %p137
      $region14: #{tpu_custom_call.1} parent=5 // pred_check_branch
        %140 = sbr.rel (%p138) target = $region16
      $region15: #{tpu_custom_call.1} parent=5 // pred_region
        // Predicated region
        $region17: #{tpu_custom_call.1} parent=15 // pred_check
          %p141 = pneg %p38
        $region18: #{tpu_custom_call.1} parent=15 // pred_check_branch
          %143 = sbr.rel (%p141) target = $region20
        $region19: #{tpu_custom_call.1} parent=15 // pred_region
          %s144 = sand.u32 %s28, 1
          %s145 = scalar_lea.sflag [#allocation3], %s144
          %s146 = sand.u32 %s28, 1
          %s147 = smul.addr %s146, 8
          %s148 = scalar_lea.vmem [#allocation2], %s147
          %s150 = ssub.s32 128, 128
          %151 = vsyncadd %s145, %s150
          %s152 = smul.addr %s18, 128
          %s153 = scalar_lea.hbm %s0, %s152
          %s155 = sshll.u32 %s148, 4
          %s156 = int_to_ptr.vmem [resolvable:$true] %s155
          %158 = dma.hbm_to_vmem [thread:$0]  %s153, 128, %s156, %s145
        $region20: #{tpu_custom_call.1} parent=15 // pred_fallthru
          _
        // Predicated region
        $region21: #{tpu_custom_call.1} parent=15 // pred_check
          %p159 = pneg %p64
        $region22: #{tpu_custom_call.1} parent=15 // pred_check_branch
          %161 = sbr.rel (%p159) target = $region24
        $region23: #{tpu_custom_call.1} parent=15 // pred_region
          %s162 = sand.u32 %s18, 1
          %s163 = scalar_lea.sflag [#allocation6], %s162
          %s164 = sand.u32 %s54, 1
          %s165 = smul.addr %s164, 8
          %s166 = scalar_lea.vmem [#allocation5], %s165
          %s168 = ssub.s32 128, 128
          %169 = vsyncadd %s163, %s168
          %s170 = smul.addr %s18, 128
          %s171 = scalar_lea.hbm %s1, %s170
          %s173 = sshll.u32 %s166, 4
          %s174 = int_to_ptr.vmem [resolvable:$true] %s173
          %176 = dma.hbm_to_vmem [thread:$0]  %s171, 128, %s174, %s163
        $region24: #{tpu_custom_call.1} parent=15 // pred_fallthru
          _
        // Predicated region
        $region25: #{tpu_custom_call.1} parent=15 // pred_check
          %p177 = pneg %p90
        $region26: #{tpu_custom_call.1} parent=15 // pred_check_branch
          %179 = sbr.rel (%p177) target = $region28
        $region27: #{tpu_custom_call.1} parent=15 // pred_region
          %s180 = sand.u32 %s18, 1
          %s181 = scalar_lea.sflag [#allocation6], %s180
          %s182 = sand.u32 %s80, 1
          %s183 = smul.addr %s182, 8
          %s184 = scalar_lea.vmem [#allocation7], %s183
          %s186 = ssub.s32 128, 128
          %187 = vsyncadd %s181, %s186
          %s188 = smul.addr %s18, 128
          %s189 = scalar_lea.hbm %s2, %s188
          %s191 = sshll.u32 %s184, 4
          %s192 = int_to_ptr.vmem [resolvable:$true] %s191
          %194 = dma.hbm_to_vmem [thread:$0]  %s189, 128, %s192, %s181
        $region28: #{tpu_custom_call.1} parent=15 // pred_fallthru
          _
      $region16: #{tpu_custom_call.1} parent=5 // pred_fallthru
        _
      %p195 = scmp.le.s32.totalorder 1, %s18
      %p196 = scmp.lt.s32.totalorder %s18, 3
      %p197 = pnand %p195, %p196
      %p198 = pneg %p197
      // Predicated region
      $region29: #{tpu_custom_call.1} parent=5 // pred_check
        _
      $region30: #{tpu_custom_call.1} parent=5 // pred_check_branch
        %200 = sbr.rel (%p197) target = $region32
      $region31: #{tpu_custom_call.1} parent=5 // pred_region
        %s201 = ssub.s32 %s18, 1
        %s202 = sand.u32 %s31, 1
        %s203 = scalar_lea.sflag [#allocation3], %s202
        %s204 = sand.u32 %s31, 1
        %s205 = smul.addr %s204, 8
        %s206 = scalar_lea.vmem [#allocation2], %s205
        // Predicated region
        $region33: #{tpu_custom_call.1} parent=31 // pred_check
          %p207 = pneg %p44
        $region34: #{tpu_custom_call.1} parent=31 // pred_check_branch
          %209 = sbr.rel (%p207) target = $region36
        $region35: #{tpu_custom_call.1} parent=31 // pred_region
          %210 = dma.done %s203, 128
        $region36: #{tpu_custom_call.1} parent=31 // pred_fallthru
          _
        %s211 = sand.u32 %s23, 1
        %s212 = scalar_lea.sflag [#allocation6], %s211
        %s213 = sand.u32 %s57, 1
        %s214 = smul.addr %s213, 8
        %s215 = scalar_lea.vmem [#allocation5], %s214
        // Predicated region
        $region37: #{tpu_custom_call.1} parent=31 // pred_check
          %p216 = pneg %p70
        $region38: #{tpu_custom_call.1} parent=31 // pred_check_branch
          %218 = sbr.rel (%p216) target = $region40
        $region39: #{tpu_custom_call.1} parent=31 // pred_region
          %219 = dma.done %s212, 128
        $region40: #{tpu_custom_call.1} parent=31 // pred_fallthru
          _
        %s220 = sand.u32 %s23, 1
        %s221 = scalar_lea.sflag [#allocation6], %s220
        %s222 = sand.u32 %s83, 1
        %s223 = smul.addr %s222, 8
        %s224 = scalar_lea.vmem [#allocation7], %s223
        // Predicated region
        $region41: #{tpu_custom_call.1} parent=31 // pred_check
          %p225 = pneg %p96
        $region42: #{tpu_custom_call.1} parent=31 // pred_check_branch
          %227 = sbr.rel (%p225) target = $region44
        $region43: #{tpu_custom_call.1} parent=31 // pred_region
          %228 = dma.done %s221, 128
        $region44: #{tpu_custom_call.1} parent=31 // pred_fallthru
          _
        %s229 = sand.u32 %s31, 1
        %s230 = scalar_lea.sflag [#allocation3], %s229
        %s231 = sand.u32 %s31, 1
        %s232 = smul.addr %s231, 8
        %s233 = scalar_lea.vmem [#allocation2], %s232
        %p234 = pneg %p44
        %p235 = pneg %p41
        %s236 = sand.u32 %s23, 1
        %s237 = scalar_lea.sflag [#allocation6], %s236
        %s238 = sand.u32 %s57, 1
        %s239 = smul.addr %s238, 8
        %s240 = scalar_lea.vmem [#allocation5], %s239
        %p241 = pneg %p70
        %p242 = pneg %p67
        %s243 = sand.u32 %s23, 1
        %s244 = scalar_lea.sflag [#allocation6], %s243
        %s245 = sand.u32 %s83, 1
        %s246 = smul.addr %s245, 8
        %s247 = scalar_lea.vmem [#allocation7], %s246
        %p248 = pneg %p96
        %p249 = pneg %p93
        %p250 = pneg %p122
        %p251 = pneg %p119
        %s252 = sand.u32 %s109, 1
        %s253 = scalar_lea.sflag [#allocation4], %s252
        %s254 = sand.u32 %s109, 1
        %s255 = smul.addr %s254, 8
        %s256 = scalar_lea.vmem [#allocation8], %s255
        %v257 = vld [vmem:[%s206] sm:$0xff]
        %v258 = vld [vmem:[%s215] sm:$0xff]
        %v259 = vld [vmem:[%s224] sm:$0xff]
        %vm260 = vcmask 31744
        %v262 = vsel %vm260, %v257, 0
        %v265 = vsel %vm260, %v258, 0
        %267 = vmatprep.subr.mxu0 0.0
        %268 = vmatpush1.xpose.msra.mxu0 %v265
        %269 = vmatprep.subr.mxu0 0.0
        %270 = vmatpush1.xpose.msra.mxu0 0.0
        %271 = vmatprep.subr.mxu0 0.0
        %272 = vmatpush1.xpose.msra.mxu0 0.0
        %273 = vmatprep.subr.mxu0 0.0
        %274 = vmatpush1.xpose.msra.mxu0 0.0
        %275 = vmatprep.subr.mxu0 0.0
        %276 = vmatpush1.xpose.msra.mxu0 0.0
        %277 = vmatprep.subr.mxu0 0.0
        %278 = vmatpush1.xpose.msra.mxu0 0.0
        %279 = vmatprep.subr.mxu0 0.0
        %280 = vmatpush1.xpose.msra.mxu0 0.0
        %281 = vmatprep.subr.mxu0 0.0
        %282 = vmatpush1.xpose.msra.mxu0 0.0
        %283 = vmatprep.subr.mxu0 0.0
        %284 = vmatpush1.xpose.msra.mxu0 0.0
        %285 = vmatprep.subr.mxu0 0.0
        %286 = vmatpush1.xpose.msra.mxu0 0.0
        %287 = vmatprep.subr.mxu0 0.0
        %288 = vmatpush1.xpose.msra.mxu0 0.0
        %289 = vmatprep.subr.mxu0 0.0
        %290 = vmatpush1.xpose.msra.mxu0 0.0
        %291 = vmatprep.subr.mxu0 0.0
        %292 = vmatpush1.xpose.msra.mxu0 0.0
        %293 = vmatprep.subr.mxu0 0.0
        %294 = vmatpush1.xpose.msra.mxu0 0.0
        %295 = vmatprep.subr.mxu0 0.0
        %296 = vmatpush1.xpose.msra.mxu0 0.0
        %297 = vmatprep.subr.mxu0 0.0
        %298 = vmatpush1.xpose.msra.mxu0 0.0
        %299 = vmatprep.subr.mxu0 0.0
        %300 = vmatpush1.xpose.msra.mxu0 0.0
        %301 = vmatprep.subr.mxu0 0.0
        %302 = vmatpush1.xpose.msra.mxu0 0.0
        %303 = vmatprep.subr.mxu0 0.0
        %304 = vmatpush1.xpose.msra.mxu0 0.0
        %305 = vmatprep.subr.mxu0 0.0
        %306 = vmatpush1.xpose.msra.mxu0 0.0
        %307 = vmatprep.subr.mxu0 0.0
        %308 = vmatpush1.xpose.msra.mxu0 0.0
        %309 = vmatprep.subr.mxu0 0.0
        %310 = vmatpush1.xpose.msra.mxu0 0.0
        %311 = vmatprep.subr.mxu0 0.0
        %312 = vmatpush1.xpose.msra.mxu0 0.0
        %313 = vmatprep.subr.mxu0 0.0
        %314 = vmatpush1.xpose.msra.mxu0 0.0
        %315 = vmatprep.subr.mxu0 0.0
        %316 = vmatpush1.xpose.msra.mxu0 0.0
        %317 = vmatprep.subr.mxu0 0.0
        %318 = vmatpush1.xpose.msra.mxu0 0.0
        %319 = vmatprep.subr.mxu0 0.0
        %320 = vmatpush1.xpose.msra.mxu0 0.0
        %321 = vmatprep.subr.mxu0 0.0
        %322 = vmatpush1.xpose.msra.mxu0 0.0
        %323 = vmatprep.subr.mxu0 0.0
        %324 = vmatpush1.xpose.msra.mxu0 0.0
        %325 = vmatprep.subr.mxu0 0.0
        %326 = vmatpush1.xpose.msra.mxu0 0.0
        %327 = vmatprep.subr.mxu0 0.0
        %328 = vmatpush1.xpose.msra.mxu0 0.0
        %329 = vmatprep.subr.mxu0 0.0
        %330 = vmatpush1.xpose.msra.mxu0 0.0
        %331 = vmatprep.mubr.f32.mxu0 0.0
        %332 = vmatmul.mubr.f32.gmra.mrb[0].mxu0 %v262
        %v333 = vpop.f32.mrb[0].mxu0
        %v334 = vadd.f32 0.0, %v333
        %v335 = vpop.f32.mrb[0].mxu0
        %336 = vdwg.mxu0
        %v337 = vmul.f32 %v334, 0.5
        %vm338 = vcmask 64512
        %v339 = vsel %vm338, %v337, -inf
        %340 = vmax.xlane.f32.xlu0 %v339
        %v341 = vpop.xlane.xlu0 %340
        %v342 = vsub.f32 %v337, %v341
        %v343 = vmul.f32 %v342, 1.442695
        %v344 = vpow.pop %v343
        %v345 = vsel %vm338, %v344, 0.0
        %346 = vadd.xlane.f32.xlu0 %v345
        %v347 = vpop.xlane.xlu0 %346
        %v348 = vrcp.pop %v347
        %v349 = vmul.f32 %v344, %v348
        %v351 = vsel %vm338, %v349, 0
        %353 = vmatprep.subr.mxu0 0.0
        %354 = vmatpush1.msra.mxu0 %v259
        %355 = vmatprep.subr.mxu0 0.0
        %356 = vmatpush1.msra.mxu0 0.0
        %357 = vmatprep.subr.mxu0 0.0
        %358 = vmatpush1.msra.mxu0 0.0
        %359 = vmatprep.subr.mxu0 0.0
        %360 = vmatpush1.msra.mxu0 0.0
        %361 = vmatprep.subr.mxu0 0.0
        %362 = vmatpush1.msra.mxu0 0.0
        %363 = vmatprep.subr.mxu0 0.0
        %364 = vmatpush1.msra.mxu0 0.0
        %365 = vmatprep.subr.mxu0 0.0
        %366 = vmatpush1.msra.mxu0 0.0
        %367 = vmatprep.subr.mxu0 0.0
        %368 = vmatpush1.msra.mxu0 0.0
        %369 = vmatprep.subr.mxu0 0.0
        %370 = vmatpush1.msra.mxu0 0.0
        %371 = vmatprep.subr.mxu0 0.0
        %372 = vmatpush1.msra.mxu0 0.0
        %373 = vmatprep.subr.mxu0 0.0
        %374 = vmatpush1.msra.mxu0 0.0
        %375 = vmatprep.subr.mxu0 0.0
        %376 = vmatpush1.msra.mxu0 0.0
        %377 = vmatprep.subr.mxu0 0.0
        %378 = vmatpush1.msra.mxu0 0.0
        %379 = vmatprep.subr.mxu0 0.0
        %380 = vmatpush1.msra.mxu0 0.0
        %381 = vmatprep.subr.mxu0 0.0
        %382 = vmatpush1.msra.mxu0 0.0
        %383 = vmatprep.subr.mxu0 0.0
        %384 = vmatpush1.msra.mxu0 0.0
        %385 = vmatprep.subr.mxu0 0.0
        %386 = vmatpush1.msra.mxu0 0.0
        %387 = vmatprep.subr.mxu0 0.0
        %388 = vmatpush1.msra.mxu0 0.0
        %389 = vmatprep.subr.mxu0 0.0
        %390 = vmatpush1.msra.mxu0 0.0
        %391 = vmatprep.subr.mxu0 0.0
        %392 = vmatpush1.msra.mxu0 0.0
        %393 = vmatprep.subr.mxu0 0.0
        %394 = vmatpush1.msra.mxu0 0.0
        %395 = vmatprep.subr.mxu0 0.0
        %396 = vmatpush1.msra.mxu0 0.0
        %397 = vmatprep.subr.mxu0 0.0
        %398 = vmatpush1.msra.mxu0 0.0
        %399 = vmatprep.subr.mxu0 0.0
        %400 = vmatpush1.msra.mxu0 0.0
        %401 = vmatprep.subr.mxu0 0.0
        %402 = vmatpush1.msra.mxu0 0.0
        %403 = vmatprep.subr.mxu0 0.0
        %404 = vmatpush1.msra.mxu0 0.0
        %405 = vmatprep.subr.mxu0 0.0
        %406 = vmatpush1.msra.mxu0 0.0
        %407 = vmatprep.subr.mxu0 0.0
        %408 = vmatpush1.msra.mxu0 0.0
        %409 = vmatprep.subr.mxu0 0.0
        %410 = vmatpush1.msra.mxu0 0.0
        %411 = vmatprep.subr.mxu0 0.0
        %412 = vmatpush1.msra.mxu0 0.0
        %413 = vmatprep.subr.mxu0 0.0
        %414 = vmatpush1.msra.mxu0 0.0
        %415 = vmatprep.subr.mxu0 0.0
        %416 = vmatpush1.msra.mxu0 0.0
        %417 = vmatprep.mubr.f32.mxu0 0.0
        %418 = vmatmul.mubr.f32.gmra.mrb[0].mxu0 %v351
        %v419 = vpop.f32.mrb[0].mxu0
        %v420 = vadd.f32 0.0, %v419
        %v421 = vpop.f32.mrb[0].mxu0
        %422 = vdwg.mxu0
        %423 = vst.msk [vmem:[%s256] sm:$0xff] %vm260, %v420
        %424 = vrot.lane.b32.xlu0 %v257, 124
        %v425 = vpop.permute.xlu0 %424
        %426 = vrot.lane.b32.xlu0 %v258, 124
        %v427 = vpop.permute.xlu0 %426
        %v428 = vsel %vm260, %v425, 0
        %v430 = vsel %vm260, %v427, 0
        %432 = vmatprep.subr.mxu0 0.0
        %433 = vmatpush1.xpose.msra.mxu0 %v430
        %434 = vmatprep.subr.mxu0 0.0
        %435 = vmatpush1.xpose.msra.mxu0 0.0
        %436 = vmatprep.subr.mxu0 0.0
        %437 = vmatpush1.xpose.msra.mxu0 0.0
        %438 = vmatprep.subr.mxu0 0.0
        %439 = vmatpush1.xpose.msra.mxu0 0.0
        %440 = vmatprep.subr.mxu0 0.0
        %441 = vmatpush1.xpose.msra.mxu0 0.0
        %442 = vmatprep.subr.mxu0 0.0
        %443 = vmatpush1.xpose.msra.mxu0 0.0
        %444 = vmatprep.subr.mxu0 0.0
        %445 = vmatpush1.xpose.msra.mxu0 0.0
        %446 = vmatprep.subr.mxu0 0.0
        %447 = vmatpush1.xpose.msra.mxu0 0.0
        %448 = vmatprep.subr.mxu0 0.0
        %449 = vmatpush1.xpose.msra.mxu0 0.0
        %450 = vmatprep.subr.mxu0 0.0
        %451 = vmatpush1.xpose.msra.mxu0 0.0
        %452 = vmatprep.subr.mxu0 0.0
        %453 = vmatpush1.xpose.msra.mxu0 0.0
        %454 = vmatprep.subr.mxu0 0.0
        %455 = vmatpush1.xpose.msra.mxu0 0.0
        %456 = vmatprep.subr.mxu0 0.0
        %457 = vmatpush1.xpose.msra.mxu0 0.0
        %458 = vmatprep.subr.mxu0 0.0
        %459 = vmatpush1.xpose.msra.mxu0 0.0
        %460 = vmatprep.subr.mxu0 0.0
        %461 = vmatpush1.xpose.msra.mxu0 0.0
        %462 = vmatprep.subr.mxu0 0.0
        %463 = vmatpush1.xpose.msra.mxu0 0.0
        %464 = vmatprep.subr.mxu0 0.0
        %465 = vmatpush1.xpose.msra.mxu0 0.0
        %466 = vmatprep.subr.mxu0 0.0
        %467 = vmatpush1.xpose.msra.mxu0 0.0
        %468 = vmatprep.subr.mxu0 0.0
        %469 = vmatpush1.xpose.msra.mxu0 0.0
        %470 = vmatprep.subr.mxu0 0.0
        %471 = vmatpush1.xpose.msra.mxu0 0.0
        %472 = vmatprep.subr.mxu0 0.0
        %473 = vmatpush1.xpose.msra.mxu0 0.0
        %474 = vmatprep.subr.mxu0 0.0
        %475 = vmatpush1.xpose.msra.mxu0 0.0
        %476 = vmatprep.subr.mxu0 0.0
        %477 = vmatpush1.xpose.msra.mxu0 0.0
        %478 = vmatprep.subr.mxu0 0.0
        %479 = vmatpush1.xpose.msra.mxu0 0.0
        %480 = vmatprep.subr.mxu0 0.0
        %481 = vmatpush1.xpose.msra.mxu0 0.0
        %482 = vmatprep.subr.mxu0 0.0
        %483 = vmatpush1.xpose.msra.mxu0 0.0
        %484 = vmatprep.subr.mxu0 0.0
        %485 = vmatpush1.xpose.msra.mxu0 0.0
        %486 = vmatprep.subr.mxu0 0.0
        %487 = vmatpush1.xpose.msra.mxu0 0.0
        %488 = vmatprep.subr.mxu0 0.0
        %489 = vmatpush1.xpose.msra.mxu0 0.0
        %490 = vmatprep.subr.mxu0 0.0
        %491 = vmatpush1.xpose.msra.mxu0 0.0
        %492 = vmatprep.subr.mxu0 0.0
        %493 = vmatpush1.xpose.msra.mxu0 0.0
        %494 = vmatprep.subr.mxu0 0.0
        %495 = vmatpush1.xpose.msra.mxu0 0.0
        %496 = vmatprep.mubr.f32.mxu0 0.0
        %497 = vmatmul.mubr.f32.gmra.mrb[0].mxu0 %v428
        %v498 = vpop.f32.mrb[0].mxu0
        %v499 = vadd.f32 0.0, %v498
        %v500 = vpop.f32.mrb[0].mxu0
        %501 = vdwg.mxu0
        %v502 = vmul.f32 %v499, 0.5
        %v503 = vsel %vm338, %v502, -inf
        %504 = vmax.xlane.f32.xlu0 %v503
        %v505 = vpop.xlane.xlu0 %504
        %v506 = vsub.f32 %v502, %v505
        %v507 = vmul.f32 %v506, 1.442695
        %v508 = vpow.pop %v507
        %v509 = vsel %vm338, %v508, 0.0
        %510 = vadd.xlane.f32.xlu0 %v509
        %v511 = vpop.xlane.xlu0 %510
        %v512 = vrcp.pop %v511
        %v513 = vmul.f32 %v508, %v512
        %515 = vrot.lane.b32.xlu0 %v259, 124
        %v516 = vpop.permute.xlu0 %515
        %v519 = vsel %vm338, %v513, 0
        %521 = vmatprep.subr.mxu0 0.0
        %522 = vmatpush1.msra.mxu0 %v516
        %523 = vmatprep.subr.mxu0 0.0
        %524 = vmatpush1.msra.mxu0 0.0
        %525 = vmatprep.subr.mxu0 0.0
        %526 = vmatpush1.msra.mxu0 0.0
        %527 = vmatprep.subr.mxu0 0.0
        %528 = vmatpush1.msra.mxu0 0.0
        %529 = vmatprep.subr.mxu0 0.0
        %530 = vmatpush1.msra.mxu0 0.0
        %531 = vmatprep.subr.mxu0 0.0
        %532 = vmatpush1.msra.mxu0 0.0
        %533 = vmatprep.subr.mxu0 0.0
        %534 = vmatpush1.msra.mxu0 0.0
        %535 = vmatprep.subr.mxu0 0.0
        %536 = vmatpush1.msra.mxu0 0.0
        %537 = vmatprep.subr.mxu0 0.0
        %538 = vmatpush1.msra.mxu0 0.0
        %539 = vmatprep.subr.mxu0 0.0
        %540 = vmatpush1.msra.mxu0 0.0
        %541 = vmatprep.subr.mxu0 0.0
        %542 = vmatpush1.msra.mxu0 0.0
        %543 = vmatprep.subr.mxu0 0.0
        %544 = vmatpush1.msra.mxu0 0.0
        %545 = vmatprep.subr.mxu0 0.0
        %546 = vmatpush1.msra.mxu0 0.0
        %547 = vmatprep.subr.mxu0 0.0
        %548 = vmatpush1.msra.mxu0 0.0
        %549 = vmatprep.subr.mxu0 0.0
        %550 = vmatpush1.msra.mxu0 0.0
        %551 = vmatprep.subr.mxu0 0.0
        %552 = vmatpush1.msra.mxu0 0.0
        %553 = vmatprep.subr.mxu0 0.0
        %554 = vmatpush1.msra.mxu0 0.0
        %555 = vmatprep.subr.mxu0 0.0
        %556 = vmatpush1.msra.mxu0 0.0
        %557 = vmatprep.subr.mxu0 0.0
        %558 = vmatpush1.msra.mxu0 0.0
        %559 = vmatprep.subr.mxu0 0.0
        %560 = vmatpush1.msra.mxu0 0.0
        %561 = vmatprep.subr.mxu0 0.0
        %562 = vmatpush1.msra.mxu0 0.0
        %563 = vmatprep.subr.mxu0 0.0
        %564 = vmatpush1.msra.mxu0 0.0
        %565 = vmatprep.subr.mxu0 0.0
        %566 = vmatpush1.msra.mxu0 0.0
        %567 = vmatprep.subr.mxu0 0.0
        %568 = vmatpush1.msra.mxu0 0.0
        %569 = vmatprep.subr.mxu0 0.0
        %570 = vmatpush1.msra.mxu0 0.0
        %571 = vmatprep.subr.mxu0 0.0
        %572 = vmatpush1.msra.mxu0 0.0
        %573 = vmatprep.subr.mxu0 0.0
        %574 = vmatpush1.msra.mxu0 0.0
        %575 = vmatprep.subr.mxu0 0.0
        %576 = vmatpush1.msra.mxu0 0.0
        %577 = vmatprep.subr.mxu0 0.0
        %578 = vmatpush1.msra.mxu0 0.0
        %579 = vmatprep.subr.mxu0 0.0
        %580 = vmatpush1.msra.mxu0 0.0
        %581 = vmatprep.subr.mxu0 0.0
        %582 = vmatpush1.msra.mxu0 0.0
        %583 = vmatprep.subr.mxu0 0.0
        %584 = vmatpush1.msra.mxu0 0.0
        %585 = vmatprep.mubr.f32.mxu0 0.0
        %586 = vmatmul.mubr.f32.gmra.mrb[0].mxu0 %v519
        %v587 = vpop.f32.mrb[0].mxu0
        %v588 = vadd.f32 0.0, %v587
        %v589 = vpop.f32.mrb[0].mxu0
        %590 = vdwg.mxu0
        %592 = vrot.lane.b32.xlu0 %v588, 4
        %v593 = vpop.permute.xlu0 %592
        %vm595 = vcmask 64544
        %596 = vst.msk [vmem:[%s256] sm:$0xff] %vm595, %v593
        %597 = vrot.lane.b32.xlu0 %v257, 120
        %v598 = vpop.permute.xlu0 %597
        %599 = vrot.lane.b32.xlu0 %v258, 120
        %v600 = vpop.permute.xlu0 %599
        %v601 = vsel %vm260, %v598, 0
        %v603 = vsel %vm260, %v600, 0
        %605 = vmatprep.subr.mxu0 0.0
        %606 = vmatpush1.xpose.msra.mxu0 %v603
        %607 = vmatprep.subr.mxu0 0.0
        %608 = vmatpush1.xpose.msra.mxu0 0.0
        %609 = vmatprep.subr.mxu0 0.0
        %610 = vmatpush1.xpose.msra.mxu0 0.0
        %611 = vmatprep.subr.mxu0 0.0
        %612 = vmatpush1.xpose.msra.mxu0 0.0
        %613 = vmatprep.subr.mxu0 0.0
        %614 = vmatpush1.xpose.msra.mxu0 0.0
        %615 = vmatprep.subr.mxu0 0.0
        %616 = vmatpush1.xpose.msra.mxu0 0.0
        %617 = vmatprep.subr.mxu0 0.0
        %618 = vmatpush1.xpose.msra.mxu0 0.0
        %619 = vmatprep.subr.mxu0 0.0
        %620 = vmatpush1.xpose.msra.mxu0 0.0
        %621 = vmatprep.subr.mxu0 0.0
        %622 = vmatpush1.xpose.msra.mxu0 0.0
        %623 = vmatprep.subr.mxu0 0.0
        %624 = vmatpush1.xpose.msra.mxu0 0.0
        %625 = vmatprep.subr.mxu0 0.0
        %626 = vmatpush1.xpose.msra.mxu0 0.0
        %627 = vmatprep.subr.mxu0 0.0
        %628 = vmatpush1.xpose.msra.mxu0 0.0
        %629 = vmatprep.subr.mxu0 0.0
        %630 = vmatpush1.xpose.msra.mxu0 0.0
        %631 = vmatprep.subr.mxu0 0.0
        %632 = vmatpush1.xpose.msra.mxu0 0.0
        %633 = vmatprep.subr.mxu0 0.0
        %634 = vmatpush1.xpose.msra.mxu0 0.0
        %635 = vmatprep.subr.mxu0 0.0
        %636 = vmatpush1.xpose.msra.mxu0 0.0
        %637 = vmatprep.subr.mxu0 0.0
        %638 = vmatpush1.xpose.msra.mxu0 0.0
        %639 = vmatprep.subr.mxu0 0.0
        %640 = vmatpush1.xpose.msra.mxu0 0.0
        %641 = vmatprep.subr.mxu0 0.0
        %642 = vmatpush1.xpose.msra.mxu0 0.0
        %643 = vmatprep.subr.mxu0 0.0
        %644 = vmatpush1.xpose.msra.mxu0 0.0
        %645 = vmatprep.subr.mxu0 0.0
        %646 = vmatpush1.xpose.msra.mxu0 0.0
        %647 = vmatprep.subr.mxu0 0.0
        %648 = vmatpush1.xpose.msra.mxu0 0.0
        %649 = vmatprep.subr.mxu0 0.0
        %650 = vmatpush1.xpose.msra.mxu0 0.0
        %651 = vmatprep.subr.mxu0 0.0
        %652 = vmatpush1.xpose.msra.mxu0 0.0
        %653 = vmatprep.subr.mxu0 0.0
        %654 = vmatpush1.xpose.msra.mxu0 0.0
        %655 = vmatprep.subr.mxu0 0.0
        %656 = vmatpush1.xpose.msra.mxu0 0.0
        %657 = vmatprep.subr.mxu0 0.0
        %658 = vmatpush1.xpose.msra.mxu0 0.0
        %659 = vmatprep.subr.mxu0 0.0
        %660 = vmatpush1.xpose.msra.mxu0 0.0
        %661 = vmatprep.subr.mxu0 0.0
        %662 = vmatpush1.xpose.msra.mxu0 0.0
        %663 = vmatprep.subr.mxu0 0.0
        %664 = vmatpush1.xpose.msra.mxu0 0.0
        %665 = vmatprep.subr.mxu0 0.0
        %666 = vmatpush1.xpose.msra.mxu0 0.0
        %667 = vmatprep.subr.mxu0 0.0
        %668 = vmatpush1.xpose.msra.mxu0 0.0
        %669 = vmatprep.mubr.f32.mxu0 0.0
        %670 = vmatmul.mubr.f32.gmra.mrb[0].mxu0 %v601
        %v671 = vpop.f32.mrb[0].mxu0
        %v672 = vadd.f32 0.0, %v671
        %v673 = vpop.f32.mrb[0].mxu0
        %674 = vdwg.mxu0
        %v675 = vmul.f32 %v672, 0.5
        %v676 = vsel %vm338, %v675, -inf
        %677 = vmax.xlane.f32.xlu0 %v676
        %v678 = vpop.xlane.xlu0 %677
        %v679 = vsub.f32 %v675, %v678
        %v680 = vmul.f32 %v679, 1.442695
        %v681 = vpow.pop %v680
        %v682 = vsel %vm338, %v681, 0.0
        %683 = vadd.xlane.f32.xlu0 %v682
        %v684 = vpop.xlane.xlu0 %683
        %v685 = vrcp.pop %v684
        %v686 = vmul.f32 %v681, %v685
        %687 = vrot.lane.b32.xlu0 %v259, 120
        %v688 = vpop.permute.xlu0 %687
        %v691 = vsel %vm338, %v686, 0
        %693 = vmatprep.subr.mxu0 0.0
        %694 = vmatpush1.msra.mxu0 %v688
        %695 = vmatprep.subr.mxu0 0.0
        %696 = vmatpush1.msra.mxu0 0.0
        %697 = vmatprep.subr.mxu0 0.0
        %698 = vmatpush1.msra.mxu0 0.0
        %699 = vmatprep.subr.mxu0 0.0
        %700 = vmatpush1.msra.mxu0 0.0
        %701 = vmatprep.subr.mxu0 0.0
        %702 = vmatpush1.msra.mxu0 0.0
        %703 = vmatprep.subr.mxu0 0.0
        %704 = vmatpush1.msra.mxu0 0.0
        %705 = vmatprep.subr.mxu0 0.0
        %706 = vmatpush1.msra.mxu0 0.0
        %707 = vmatprep.subr.mxu0 0.0
        %708 = vmatpush1.msra.mxu0 0.0
        %709 = vmatprep.subr.mxu0 0.0
        %710 = vmatpush1.msra.mxu0 0.0
        %711 = vmatprep.subr.mxu0 0.0
        %712 = vmatpush1.msra.mxu0 0.0
        %713 = vmatprep.subr.mxu0 0.0
        %714 = vmatpush1.msra.mxu0 0.0
        %715 = vmatprep.subr.mxu0 0.0
        %716 = vmatpush1.msra.mxu0 0.0
        %717 = vmatprep.subr.mxu0 0.0
        %718 = vmatpush1.msra.mxu0 0.0
        %719 = vmatprep.subr.mxu0 0.0
        %720 = vmatpush1.msra.mxu0 0.0
        %721 = vmatprep.subr.mxu0 0.0
        %722 = vmatpush1.msra.mxu0 0.0
        %723 = vmatprep.subr.mxu0 0.0
        %724 = vmatpush1.msra.mxu0 0.0
        %725 = vmatprep.subr.mxu0 0.0
        %726 = vmatpush1.msra.mxu0 0.0
        %727 = vmatprep.subr.mxu0 0.0
        %728 = vmatpush1.msra.mxu0 0.0
        %729 = vmatprep.subr.mxu0 0.0
        %730 = vmatpush1.msra.mxu0 0.0
        %731 = vmatprep.subr.mxu0 0.0
        %732 = vmatpush1.msra.mxu0 0.0
        %733 = vmatprep.subr.mxu0 0.0
        %734 = vmatpush1.msra.mxu0 0.0
        %735 = vmatprep.subr.mxu0 0.0
        %736 = vmatpush1.msra.mxu0 0.0
        %737 = vmatprep.subr.mxu0 0.0
        %738 = vmatpush1.msra.mxu0 0.0
        %739 = vmatprep.subr.mxu0 0.0
        %740 = vmatpush1.msra.mxu0 0.0
        %741 = vmatprep.subr.mxu0 0.0
        %742 = vmatpush1.msra.mxu0 0.0
        %743 = vmatprep.subr.mxu0 0.0
        %744 = vmatpush1.msra.mxu0 0.0
        %745 = vmatprep.subr.mxu0 0.0
        %746 = vmatpush1.msra.mxu0 0.0
        %747 = vmatprep.subr.mxu0 0.0
        %748 = vmatpush1.msra.mxu0 0.0
        %749 = vmatprep.subr.mxu0 0.0
        %750 = vmatpush1.msra.mxu0 0.0
        %751 = vmatprep.subr.mxu0 0.0
        %752 = vmatpush1.msra.mxu0 0.0
        %753 = vmatprep.subr.mxu0 0.0
        %754 = vmatpush1.msra.mxu0 0.0
        %755 = vmatprep.subr.mxu0 0.0
        %756 = vmatpush1.msra.mxu0 0.0
        %757 = vmatprep.mubr.f32.mxu0 0.0
        %758 = vmatmul.mubr.f32.gmra.mrb[0].mxu0 %v691
        %v759 = vpop.f32.mrb[0].mxu0
        %v760 = vadd.f32 0.0, %v759
        %v761 = vpop.f32.mrb[0].mxu0
        %762 = vdwg.mxu0
        %764 = vrot.lane.b32.xlu0 %v760, 8
        %v765 = vpop.permute.xlu0 %764
        %vm767 = vcmask 97344
        %768 = vst.msk [vmem:[%s256] sm:$0xff] %vm767, %v765
        %769 = vrot.lane.b32.xlu0 %v257, 116
        %v770 = vpop.permute.xlu0 %769
        %771 = vrot.lane.b32.xlu0 %v258, 116
        %v772 = vpop.permute.xlu0 %771
        %v773 = vsel %vm260, %v770, 0
        %v775 = vsel %vm260, %v772, 0
        %777 = vmatprep.subr.mxu0 0.0
        %778 = vmatpush1.xpose.msra.mxu0 %v775
        %779 = vmatprep.subr.mxu0 0.0
        %780 = vmatpush1.xpose.msra.mxu0 0.0
        %781 = vmatprep.subr.mxu0 0.0
        %782 = vmatpush1.xpose.msra.mxu0 0.0
        %783 = vmatprep.subr.mxu0 0.0
        %784 = vmatpush1.xpose.msra.mxu0 0.0
        %785 = vmatprep.subr.mxu0 0.0
        %786 = vmatpush1.xpose.msra.mxu0 0.0
        %787 = vmatprep.subr.mxu0 0.0
        %788 = vmatpush1.xpose.msra.mxu0 0.0
        %789 = vmatprep.subr.mxu0 0.0
        %790 = vmatpush1.xpose.msra.mxu0 0.0
        %791 = vmatprep.subr.mxu0 0.0
        %792 = vmatpush1.xpose.msra.mxu0 0.0
        %793 = vmatprep.subr.mxu0 0.0
        %794 = vmatpush1.xpose.msra.mxu0 0.0
        %795 = vmatprep.subr.mxu0 0.0
        %796 = vmatpush1.xpose.msra.mxu0 0.0
        %797 = vmatprep.subr.mxu0 0.0
        %798 = vmatpush1.xpose.msra.mxu0 0.0
        %799 = vmatprep.subr.mxu0 0.0
        %800 = vmatpush1.xpose.msra.mxu0 0.0
        %801 = vmatprep.subr.mxu0 0.0
        %802 = vmatpush1.xpose.msra.mxu0 0.0
        %803 = vmatprep.subr.mxu0 0.0
        %804 = vmatpush1.xpose.msra.mxu0 0.0
        %805 = vmatprep.subr.mxu0 0.0
        %806 = vmatpush1.xpose.msra.mxu0 0.0
        %807 = vmatprep.subr.mxu0 0.0
        %808 = vmatpush1.xpose.msra.mxu0 0.0
        %809 = vmatprep.subr.mxu0 0.0
        %810 = vmatpush1.xpose.msra.mxu0 0.0
        %811 = vmatprep.subr.mxu0 0.0
        %812 = vmatpush1.xpose.msra.mxu0 0.0
        %813 = vmatprep.subr.mxu0 0.0
        %814 = vmatpush1.xpose.msra.mxu0 0.0
        %815 = vmatprep.subr.mxu0 0.0
        %816 = vmatpush1.xpose.msra.mxu0 0.0
        %817 = vmatprep.subr.mxu0 0.0
        %818 = vmatpush1.xpose.msra.mxu0 0.0
        %819 = vmatprep.subr.mxu0 0.0
        %820 = vmatpush1.xpose.msra.mxu0 0.0
        %821 = vmatprep.subr.mxu0 0.0
        %822 = vmatpush1.xpose.msra.mxu0 0.0
        %823 = vmatprep.subr.mxu0 0.0
        %824 = vmatpush1.xpose.msra.mxu0 0.0
        %825 = vmatprep.subr.mxu0 0.0
        %826 = vmatpush1.xpose.msra.mxu0 0.0
        %827 = vmatprep.subr.mxu0 0.0
        %828 = vmatpush1.xpose.msra.mxu0 0.0
        %829 = vmatprep.subr.mxu0 0.0
        %830 = vmatpush1.xpose.msra.mxu0 0.0
        %831 = vmatprep.subr.mxu0 0.0
        %832 = vmatpush1.xpose.msra.mxu0 0.0
        %833 = vmatprep.subr.mxu0 0.0
        %834 = vmatpush1.xpose.msra.mxu0 0.0
        %835 = vmatprep.subr.mxu0 0.0
        %836 = vmatpush1.xpose.msra.mxu0 0.0
        %837 = vmatprep.subr.mxu0 0.0
        %838 = vmatpush1.xpose.msra.mxu0 0.0
        %839 = vmatprep.subr.mxu0 0.0
        %840 = vmatpush1.xpose.msra.mxu0 0.0
        %841 = vmatprep.mubr.f32.mxu0 0.0
        %842 = vmatmul.mubr.f32.gmra.mrb[0].mxu0 %v773
        %v843 = vpop.f32.mrb[0].mxu0
        %v844 = vadd.f32 0.0, %v843
        %v845 = vpop.f32.mrb[0].mxu0
        %846 = vdwg.mxu0
        %v847 = vmul.f32 %v844, 0.5
        %v848 = vsel %vm338, %v847, -inf
        %849 = vmax.xlane.f32.xlu0 %v848
        %v850 = vpop.xlane.xlu0 %849
        %v851 = vsub.f32 %v847, %v850
        %v852 = vmul.f32 %v851, 1.442695
        %v853 = vpow.pop %v852
        %v854 = vsel %vm338, %v853, 0.0
        %855 = vadd.xlane.f32.xlu0 %v854
        %v856 = vpop.xlane.xlu0 %855
        %v857 = vrcp.pop %v856
        %v858 = vmul.f32 %v853, %v857
        %859 = vrot.lane.b32.xlu0 %v259, 116
        %v860 = vpop.permute.xlu0 %859
        %v863 = vsel %vm338, %v858, 0
        %865 = vmatprep.subr.mxu0 0.0
        %866 = vmatpush1.msra.mxu0 %v860
        %867 = vmatprep.subr.mxu0 0.0
        %868 = vmatpush1.msra.mxu0 0.0
        %869 = vmatprep.subr.mxu0 0.0
        %870 = vmatpush1.msra.mxu0 0.0
        %871 = vmatprep.subr.mxu0 0.0
        %872 = vmatpush1.msra.mxu0 0.0
        %873 = vmatprep.subr.mxu0 0.0
        %874 = vmatpush1.msra.mxu0 0.0
        %875 = vmatprep.subr.mxu0 0.0
        %876 = vmatpush1.msra.mxu0 0.0
        %877 = vmatprep.subr.mxu0 0.0
        %878 = vmatpush1.msra.mxu0 0.0
        %879 = vmatprep.subr.mxu0 0.0
        %880 = vmatpush1.msra.mxu0 0.0
        %881 = vmatprep.subr.mxu0 0.0
        %882 = vmatpush1.msra.mxu0 0.0
        %883 = vmatprep.subr.mxu0 0.0
        %884 = vmatpush1.msra.mxu0 0.0
        %885 = vmatprep.subr.mxu0 0.0
        %886 = vmatpush1.msra.mxu0 0.0
        %887 = vmatprep.subr.mxu0 0.0
        %888 = vmatpush1.msra.mxu0 0.0
        %889 = vmatprep.subr.mxu0 0.0
        %890 = vmatpush1.msra.mxu0 0.0
        %891 = vmatprep.subr.mxu0 0.0
        %892 = vmatpush1.msra.mxu0 0.0
        %893 = vmatprep.subr.mxu0 0.0
        %894 = vmatpush1.msra.mxu0 0.0
        %895 = vmatprep.subr.mxu0 0.0
        %896 = vmatpush1.msra.mxu0 0.0
        %897 = vmatprep.subr.mxu0 0.0
        %898 = vmatpush1.msra.mxu0 0.0
        %899 = vmatprep.subr.mxu0 0.0
        %900 = vmatpush1.msra.mxu0 0.0
        %901 = vmatprep.subr.mxu0 0.0
        %902 = vmatpush1.msra.mxu0 0.0
        %903 = vmatprep.subr.mxu0 0.0
        %904 = vmatpush1.msra.mxu0 0.0
        %905 = vmatprep.subr.mxu0 0.0
        %906 = vmatpush1.msra.mxu0 0.0
        %907 = vmatprep.subr.mxu0 0.0
        %908 = vmatpush1.msra.mxu0 0.0
        %909 = vmatprep.subr.mxu0 0.0
        %910 = vmatpush1.msra.mxu0 0.0
        %911 = vmatprep.subr.mxu0 0.0
        %912 = vmatpush1.msra.mxu0 0.0
        %913 = vmatprep.subr.mxu0 0.0
        %914 = vmatpush1.msra.mxu0 0.0
        %915 = vmatprep.subr.mxu0 0.0
        %916 = vmatpush1.msra.mxu0 0.0
        %917 = vmatprep.subr.mxu0 0.0
        %918 = vmatpush1.msra.mxu0 0.0
        %919 = vmatprep.subr.mxu0 0.0
        %920 = vmatpush1.msra.mxu0 0.0
        %921 = vmatprep.subr.mxu0 0.0
        %922 = vmatpush1.msra.mxu0 0.0
        %923 = vmatprep.subr.mxu0 0.0
        %924 = vmatpush1.msra.mxu0 0.0
        %925 = vmatprep.subr.mxu0 0.0
        %926 = vmatpush1.msra.mxu0 0.0
        %927 = vmatprep.subr.mxu0 0.0
        %928 = vmatpush1.msra.mxu0 0.0
        %929 = vmatprep.mubr.f32.mxu0 0.0
        %930 = vmatmul.mubr.f32.gmra.mrb[0].mxu0 %v863
        %v931 = vpop.f32.mrb[0].mxu0
        %v932 = vadd.f32 0.0, %v931
        %v933 = vpop.f32.mrb[0].mxu0
        %934 = vdwg.mxu0
        %936 = vrot.lane.b32.xlu0 %v932, 12
        %v937 = vpop.permute.xlu0 %936
        %vm939 = vcmask 130144
        %940 = vst.msk [vmem:[%s256] sm:$0xff] %vm939, %v937
        %941 = vrot.lane.b32.xlu0 %v257, 112
        %v942 = vpop.permute.xlu0 %941
        %943 = vrot.lane.b32.xlu0 %v258, 112
        %v944 = vpop.permute.xlu0 %943
        %v945 = vsel %vm260, %v942, 0
        %v947 = vsel %vm260, %v944, 0
        %949 = vmatprep.subr.mxu0 0.0
        %950 = vmatpush1.xpose.msra.mxu0 %v947
        %951 = vmatprep.subr.mxu0 0.0
        %952 = vmatpush1.xpose.msra.mxu0 0.0
        %953 = vmatprep.subr.mxu0 0.0
        %954 = vmatpush1.xpose.msra.mxu0 0.0
        %955 = vmatprep.subr.mxu0 0.0
        %956 = vmatpush1.xpose.msra.mxu0 0.0
        %957 = vmatprep.subr.mxu0 0.0
        %958 = vmatpush1.xpose.msra.mxu0 0.0
        %959 = vmatprep.subr.mxu0 0.0
        %960 = vmatpush1.xpose.msra.mxu0 0.0
        %961 = vmatprep.subr.mxu0 0.0
        %962 = vmatpush1.xpose.msra.mxu0 0.0
        %963 = vmatprep.subr.mxu0 0.0
        %964 = vmatpush1.xpose.msra.mxu0 0.0
        %965 = vmatprep.subr.mxu0 0.0
        %966 = vmatpush1.xpose.msra.mxu0 0.0
        %967 = vmatprep.subr.mxu0 0.0
        %968 = vmatpush1.xpose.msra.mxu0 0.0
        %969 = vmatprep.subr.mxu0 0.0
        %970 = vmatpush1.xpose.msra.mxu0 0.0
        %971 = vmatprep.subr.mxu0 0.0
        %972 = vmatpush1.xpose.msra.mxu0 0.0
        %973 = vmatprep.subr.mxu0 0.0
        %974 = vmatpush1.xpose.msra.mxu0 0.0
        %975 = vmatprep.subr.mxu0 0.0
        %976 = vmatpush1.xpose.msra.mxu0 0.0
        %977 = vmatprep.subr.mxu0 0.0
        %978 = vmatpush1.xpose.msra.mxu0 0.0
        %979 = vmatprep.subr.mxu0 0.0
        %980 = vmatpush1.xpose.msra.mxu0 0.0
        %981 = vmatprep.subr.mxu0 0.0
        %982 = vmatpush1.xpose.msra.mxu0 0.0
        %983 = vmatprep.subr.mxu0 0.0
        %984 = vmatpush1.xpose.msra.mxu0 0.0
        %985 = vmatprep.subr.mxu0 0.0
        %986 = vmatpush1.xpose.msra.mxu0 0.0
        %987 = vmatprep.subr.mxu0 0.0
        %988 = vmatpush1.xpose.msra.mxu0 0.0
        %989 = vmatprep.subr.mxu0 0.0
        %990 = vmatpush1.xpose.msra.mxu0 0.0
        %991 = vmatprep.subr.mxu0 0.0
        %992 = vmatpush1.xpose.msra.mxu0 0.0
        %993 = vmatprep.subr.mxu0 0.0
        %994 = vmatpush1.xpose.msra.mxu0 0.0
        %995 = vmatprep.subr.mxu0 0.0
        %996 = vmatpush1.xpose.msra.mxu0 0.0
        %997 = vmatprep.subr.mxu0 0.0
        %998 = vmatpush1.xpose.msra.mxu0 0.0
        %999 = vmatprep.subr.mxu0 0.0
        %1000 = vmatpush1.xpose.msra.mxu0 0.0
        %1001 = vmatprep.subr.mxu0 0.0
        %1002 = vmatpush1.xpose.msra.mxu0 0.0
        %1003 = vmatprep.subr.mxu0 0.0
        %1004 = vmatpush1.xpose.msra.mxu0 0.0
        %1005 = vmatprep.subr.mxu0 0.0
        %1006 = vmatpush1.xpose.msra.mxu0 0.0
        %1007 = vmatprep.subr.mxu0 0.0
        %1008 = vmatpush1.xpose.msra.mxu0 0.0
        %1009 = vmatprep.subr.mxu0 0.0
        %1010 = vmatpush1.xpose.msra.mxu0 0.0
        %1011 = vmatprep.subr.mxu0 0.0
        %1012 = vmatpush1.xpose.msra.mxu0 0.0
        %1013 = vmatprep.mubr.f32.mxu0 0.0
        %1014 = vmatmul.mubr.f32.gmra.mrb[0].mxu0 %v945
        %v1015 = vpop.f32.mrb[0].mxu0
        %v1016 = vadd.f32 0.0, %v1015
        %v1017 = vpop.f32.mrb[0].mxu0
        %1018 = vdwg.mxu0
        %v1019 = vmul.f32 %v1016, 0.5
        %v1020 = vsel %vm338, %v1019, -inf
        %1021 = vmax.xlane.f32.xlu0 %v1020
        %v1022 = vpop.xlane.xlu0 %1021
        %v1023 = vsub.f32 %v1019, %v1022
        %v1024 = vmul.f32 %v1023, 1.442695
        %v1025 = vpow.pop %v1024
        %v1026 = vsel %vm338, %v1025, 0.0
        %1027 = vadd.xlane.f32.xlu0 %v1026
        %v1028 = vpop.xlane.xlu0 %1027
        %v1029 = vrcp.pop %v1028
        %v1030 = vmul.f32 %v1025, %v1029
        %1031 = vrot.lane.b32.xlu0 %v259, 112
        %v1032 = vpop.permute.xlu0 %1031
        %v1035 = vsel %vm338, %v1030, 0
        %1037 = vmatprep.subr.mxu0 0.0
        %1038 = vmatpush1.msra.mxu0 %v1032
        %1039 = vmatprep.subr.mxu0 0.0
        %1040 = vmatpush1.msra.mxu0 0.0
        %1041 = vmatprep.subr.mxu0 0.0
        %1042 = vmatpush1.msra.mxu0 0.0
        %1043 = vmatprep.subr.mxu0 0.0
        %1044 = vmatpush1.msra.mxu0 0.0
        %1045 = vmatprep.subr.mxu0 0.0
        %1046 = vmatpush1.msra.mxu0 0.0
        %1047 = vmatprep.subr.mxu0 0.0
        %1048 = vmatpush1.msra.mxu0 0.0
        %1049 = vmatprep.subr.mxu0 0.0
        %1050 = vmatpush1.msra.mxu0 0.0
        %1051 = vmatprep.subr.mxu0 0.0
        %1052 = vmatpush1.msra.mxu0 0.0
        %1053 = vmatprep.subr.mxu0 0.0
        %1054 = vmatpush1.msra.mxu0 0.0
        %1055 = vmatprep.subr.mxu0 0.0
        %1056 = vmatpush1.msra.mxu0 0.0
        %1057 = vmatprep.subr.mxu0 0.0
        %1058 = vmatpush1.msra.mxu0 0.0
        %1059 = vmatprep.subr.mxu0 0.0
        %1060 = vmatpush1.msra.mxu0 0.0
        %1061 = vmatprep.subr.mxu0 0.0
        %1062 = vmatpush1.msra.mxu0 0.0
        %1063 = vmatprep.subr.mxu0 0.0
        %1064 = vmatpush1.msra.mxu0 0.0
        %1065 = vmatprep.subr.mxu0 0.0
        %1066 = vmatpush1.msra.mxu0 0.0
        %1067 = vmatprep.subr.mxu0 0.0
        %1068 = vmatpush1.msra.mxu0 0.0
        %1069 = vmatprep.subr.mxu0 0.0
        %1070 = vmatpush1.msra.mxu0 0.0
        %1071 = vmatprep.subr.mxu0 0.0
        %1072 = vmatpush1.msra.mxu0 0.0
        %1073 = vmatprep.subr.mxu0 0.0
        %1074 = vmatpush1.msra.mxu0 0.0
        %1075 = vmatprep.subr.mxu0 0.0
        %1076 = vmatpush1.msra.mxu0 0.0
        %1077 = vmatprep.subr.mxu0 0.0
        %1078 = vmatpush1.msra.mxu0 0.0
        %1079 = vmatprep.subr.mxu0 0.0
        %1080 = vmatpush1.msra.mxu0 0.0
        %1081 = vmatprep.subr.mxu0 0.0
        %1082 = vmatpush1.msra.mxu0 0.0
        %1083 = vmatprep.subr.mxu0 0.0
        %1084 = vmatpush1.msra.mxu0 0.0
        %1085 = vmatprep.subr.mxu0 0.0
        %1086 = vmatpush1.msra.mxu0 0.0
        %1087 = vmatprep.subr.mxu0 0.0
        %1088 = vmatpush1.msra.mxu0 0.0
        %1089 = vmatprep.subr.mxu0 0.0
        %1090 = vmatpush1.msra.mxu0 0.0
        %1091 = vmatprep.subr.mxu0 0.0
        %1092 = vmatpush1.msra.mxu0 0.0
        %1093 = vmatprep.subr.mxu0 0.0
        %1094 = vmatpush1.msra.mxu0 0.0
        %1095 = vmatprep.subr.mxu0 0.0
        %1096 = vmatpush1.msra.mxu0 0.0
        %1097 = vmatprep.subr.mxu0 0.0
        %1098 = vmatpush1.msra.mxu0 0.0
        %1099 = vmatprep.subr.mxu0 0.0
        %1100 = vmatpush1.msra.mxu0 0.0
        %1101 = vmatprep.mubr.f32.mxu0 0.0
        %1102 = vmatmul.mubr.f32.gmra.mrb[0].mxu0 %v1035
        %v1103 = vpop.f32.mrb[0].mxu0
        %v1104 = vadd.f32 0.0, %v1103
        %v1105 = vpop.f32.mrb[0].mxu0
        %1106 = vdwg.mxu0
        %1108 = vrot.lane.b32.xlu0 %v1104, 16
        %v1109 = vpop.permute.xlu0 %1108
        %vm1111 = vcmask 162944
        %1112 = vst.msk [vmem:[%s256] sm:$0xff] %vm1111, %v1109
        %1113 = vrot.lane.b32.xlu0 %v257, 108
        %v1114 = vpop.permute.xlu0 %1113
        %1115 = vrot.lane.b32.xlu0 %v258, 108
        %v1116 = vpop.permute.xlu0 %1115
        %v1117 = vsel %vm260, %v1114, 0
        %v1119 = vsel %vm260, %v1116, 0
        %1121 = vmatprep.subr.mxu0 0.0
        %1122 = vmatpush1.xpose.msra.mxu0 %v1119
        %1123 = vmatprep.subr.mxu0 0.0
        %1124 = vmatpush1.xpose.msra.mxu0 0.0
        %1125 = vmatprep.subr.mxu0 0.0
        %1126 = vmatpush1.xpose.msra.mxu0 0.0
        %1127 = vmatprep.subr.mxu0 0.0
        %1128 = vmatpush1.xpose.msra.mxu0 0.0
        %1129 = vmatprep.subr.mxu0 0.0
        %1130 = vmatpush1.xpose.msra.mxu0 0.0
        %1131 = vmatprep.subr.mxu0 0.0
        %1132 = vmatpush1.xpose.msra.mxu0 0.0
        %1133 = vmatprep.subr.mxu0 0.0
        %1134 = vmatpush1.xpose.msra.mxu0 0.0
        %1135 = vmatprep.subr.mxu0 0.0
        %1136 = vmatpush1.xpose.msra.mxu0 0.0
        %1137 = vmatprep.subr.mxu0 0.0
        %1138 = vmatpush1.xpose.msra.mxu0 0.0
        %1139 = vmatprep.subr.mxu0 0.0
        %1140 = vmatpush1.xpose.msra.mxu0 0.0
        %1141 = vmatprep.subr.mxu0 0.0
        %1142 = vmatpush1.xpose.msra.mxu0 0.0
        %1143 = vmatprep.subr.mxu0 0.0
        %1144 = vmatpush1.xpose.msra.mxu0 0.0
        %1145 = vmatprep.subr.mxu0 0.0
        %1146 = vmatpush1.xpose.msra.mxu0 0.0
        %1147 = vmatprep.subr.mxu0 0.0
        %1148 = vmatpush1.xpose.msra.mxu0 0.0
        %1149 = vmatprep.subr.mxu0 0.0
        %1150 = vmatpush1.xpose.msra.mxu0 0.0
        %1151 = vmatprep.subr.mxu0 0.0
        %1152 = vmatpush1.xpose.msra.mxu0 0.0
        %1153 = vmatprep.subr.mxu0 0.0
        %1154 = vmatpush1.xpose.msra.mxu0 0.0
        %1155 = vmatprep.subr.mxu0 0.0
        %1156 = vmatpush1.xpose.msra.mxu0 0.0
        %1157 = vmatprep.subr.mxu0 0.0
        %1158 = vmatpush1.xpose.msra.mxu0 0.0
        %1159 = vmatprep.subr.mxu0 0.0
        %1160 = vmatpush1.xpose.msra.mxu0 0.0
        %1161 = vmatprep.subr.mxu0 0.0
        %1162 = vmatpush1.xpose.msra.mxu0 0.0
        %1163 = vmatprep.subr.mxu0 0.0
        %1164 = vmatpush1.xpose.msra.mxu0 0.0
        %1165 = vmatprep.subr.mxu0 0.0
        %1166 = vmatpush1.xpose.msra.mxu0 0.0
        %1167 = vmatprep.subr.mxu0 0.0
        %1168 = vmatpush1.xpose.msra.mxu0 0.0
        %1169 = vmatprep.subr.mxu0 0.0
        %1170 = vmatpush1.xpose.msra.mxu0 0.0
        %1171 = vmatprep.subr.mxu0 0.0
        %1172 = vmatpush1.xpose.msra.mxu0 0.0
        %1173 = vmatprep.subr.mxu0 0.0
        %1174 = vmatpush1.xpose.msra.mxu0 0.0
        %1175 = vmatprep.subr.mxu0 0.0
        %1176 = vmatpush1.xpose.msra.mxu0 0.0
        %1177 = vmatprep.subr.mxu0 0.0
        %1178 = vmatpush1.xpose.msra.mxu0 0.0
        %1179 = vmatprep.subr.mxu0 0.0
        %1180 = vmatpush1.xpose.msra.mxu0 0.0
        %1181 = vmatprep.subr.mxu0 0.0
        %1182 = vmatpush1.xpose.msra.mxu0 0.0
        %1183 = vmatprep.subr.mxu0 0.0
        %1184 = vmatpush1.xpose.msra.mxu0 0.0
        %1185 = vmatprep.mubr.f32.mxu0 0.0
        %1186 = vmatmul.mubr.f32.gmra.mrb[0].mxu0 %v1117
        %v1187 = vpop.f32.mrb[0].mxu0
        %v1188 = vadd.f32 0.0, %v1187
        %v1189 = vpop.f32.mrb[0].mxu0
        %1190 = vdwg.mxu0
        %v1191 = vmul.f32 %v1188, 0.5
        %v1192 = vsel %vm338, %v1191, -inf
        %1193 = vmax.xlane.f32.xlu0 %v1192
        %v1194 = vpop.xlane.xlu0 %1193
        %v1195 = vsub.f32 %v1191, %v1194
        %v1196 = vmul.f32 %v1195, 1.442695
        %v1197 = vpow.pop %v1196
        %v1198 = vsel %vm338, %v1197, 0.0
        %1199 = vadd.xlane.f32.xlu0 %v1198
        %v1200 = vpop.xlane.xlu0 %1199
        %v1201 = vrcp.pop %v1200
        %v1202 = vmul.f32 %v1197, %v1201
        %1203 = vrot.lane.b32.xlu0 %v259, 108
        %v1204 = vpop.permute.xlu0 %1203
        %v1207 = vsel %vm338, %v1202, 0
        %1209 = vmatprep.subr.mxu0 0.0
        %1210 = vmatpush1.msra.mxu0 %v1204
        %1211 = vmatprep.subr.mxu0 0.0
        %1212 = vmatpush1.msra.mxu0 0.0
        %1213 = vmatprep.subr.mxu0 0.0
        %1214 = vmatpush1.msra.mxu0 0.0
        %1215 = vmatprep.subr.mxu0 0.0
        %1216 = vmatpush1.msra.mxu0 0.0
        %1217 = vmatprep.subr.mxu0 0.0
        %1218 = vmatpush1.msra.mxu0 0.0
        %1219 = vmatprep.subr.mxu0 0.0
        %1220 = vmatpush1.msra.mxu0 0.0
        %1221 = vmatprep.subr.mxu0 0.0
        %1222 = vmatpush1.msra.mxu0 0.0
        %1223 = vmatprep.subr.mxu0 0.0
        %1224 = vmatpush1.msra.mxu0 0.0
        %1225 = vmatprep.subr.mxu0 0.0
        %1226 = vmatpush1.msra.mxu0 0.0
        %1227 = vmatprep.subr.mxu0 0.0
        %1228 = vmatpush1.msra.mxu0 0.0
        %1229 = vmatprep.subr.mxu0 0.0
        %1230 = vmatpush1.msra.mxu0 0.0
        %1231 = vmatprep.subr.mxu0 0.0
        %1232 = vmatpush1.msra.mxu0 0.0
        %1233 = vmatprep.subr.mxu0 0.0
        %1234 = vmatpush1.msra.mxu0 0.0
        %1235 = vmatprep.subr.mxu0 0.0
        %1236 = vmatpush1.msra.mxu0 0.0
        %1237 = vmatprep.subr.mxu0 0.0
        %1238 = vmatpush1.msra.mxu0 0.0
        %1239 = vmatprep.subr.mxu0 0.0
        %1240 = vmatpush1.msra.mxu0 0.0
        %1241 = vmatprep.subr.mxu0 0.0
        %1242 = vmatpush1.msra.mxu0 0.0
        %1243 = vmatprep.subr.mxu0 0.0
        %1244 = vmatpush1.msra.mxu0 0.0
        %1245 = vmatprep.subr.mxu0 0.0
        %1246 = vmatpush1.msra.mxu0 0.0
        %1247 = vmatprep.subr.mxu0 0.0
        %1248 = vmatpush1.msra.mxu0 0.0
        %1249 = vmatprep.subr.mxu0 0.0
        %1250 = vmatpush1.msra.mxu0 0.0
        %1251 = vmatprep.subr.mxu0 0.0
        %1252 = vmatpush1.msra.mxu0 0.0
        %1253 = vmatprep.subr.mxu0 0.0
        %1254 = vmatpush1.msra.mxu0 0.0
        %1255 = vmatprep.subr.mxu0 0.0
        %1256 = vmatpush1.msra.mxu0 0.0
        %1257 = vmatprep.subr.mxu0 0.0
        %1258 = vmatpush1.msra.mxu0 0.0
        %1259 = vmatprep.subr.mxu0 0.0
        %1260 = vmatpush1.msra.mxu0 0.0
        %1261 = vmatprep.subr.mxu0 0.0
        %1262 = vmatpush1.msra.mxu0 0.0
        %1263 = vmatprep.subr.mxu0 0.0
        %1264 = vmatpush1.msra.mxu0 0.0
        %1265 = vmatprep.subr.mxu0 0.0
        %1266 = vmatpush1.msra.mxu0 0.0
        %1267 = vmatprep.subr.mxu0 0.0
        %1268 = vmatpush1.msra.mxu0 0.0
        %1269 = vmatprep.subr.mxu0 0.0
        %1270 = vmatpush1.msra.mxu0 0.0
        %1271 = vmatprep.subr.mxu0 0.0
        %1272 = vmatpush1.msra.mxu0 0.0
        %1273 = vmatprep.mubr.f32.mxu0 0.0
        %1274 = vmatmul.mubr.f32.gmra.mrb[0].mxu0 %v1207
        %v1275 = vpop.f32.mrb[0].mxu0
        %v1276 = vadd.f32 0.0, %v1275
        %v1277 = vpop.f32.mrb[0].mxu0
        %1278 = vdwg.mxu0
        %1280 = vrot.lane.b32.xlu0 %v1276, 20
        %v1281 = vpop.permute.xlu0 %1280
        %vm1283 = vcmask 195744
        %1284 = vst.msk [vmem:[%s256] sm:$0xff] %vm1283, %v1281
        %1285 = vrot.lane.b32.xlu0 %v257, 104
        %v1286 = vpop.permute.xlu0 %1285
        %1287 = vrot.lane.b32.xlu0 %v258, 104
        %v1288 = vpop.permute.xlu0 %1287
        %v1289 = vsel %vm260, %v1286, 0
        %v1291 = vsel %vm260, %v1288, 0
        %1293 = vmatprep.subr.mxu0 0.0
        %1294 = vmatpush1.xpose.msra.mxu0 %v1291
        %1295 = vmatprep.subr.mxu0 0.0
        %1296 = vmatpush1.xpose.msra.mxu0 0.0
        %1297 = vmatprep.subr.mxu0 0.0
        %1298 = vmatpush1.xpose.msra.mxu0 0.0
        %1299 = vmatprep.subr.mxu0 0.0
        %1300 = vmatpush1.xpose.msra.mxu0 0.0
        %1301 = vmatprep.subr.mxu0 0.0
        %1302 = vmatpush1.xpose.msra.mxu0 0.0
        %1303 = vmatprep.subr.mxu0 0.0
        %1304 = vmatpush1.xpose.msra.mxu0 0.0
        %1305 = vmatprep.subr.mxu0 0.0
        %1306 = vmatpush1.xpose.msra.mxu0 0.0
        %1307 = vmatprep.subr.mxu0 0.0
        %1308 = vmatpush1.xpose.msra.mxu0 0.0
        %1309 = vmatprep.subr.mxu0 0.0
        %1310 = vmatpush1.xpose.msra.mxu0 0.0
        %1311 = vmatprep.subr.mxu0 0.0
        %1312 = vmatpush1.xpose.msra.mxu0 0.0
        %1313 = vmatprep.subr.mxu0 0.0
        %1314 = vmatpush1.xpose.msra.mxu0 0.0
        %1315 = vmatprep.subr.mxu0 0.0
        %1316 = vmatpush1.xpose.msra.mxu0 0.0
        %1317 = vmatprep.subr.mxu0 0.0
        %1318 = vmatpush1.xpose.msra.mxu0 0.0
        %1319 = vmatprep.subr.mxu0 0.0
        %1320 = vmatpush1.xpose.msra.mxu0 0.0
        %1321 = vmatprep.subr.mxu0 0.0
        %1322 = vmatpush1.xpose.msra.mxu0 0.0
        %1323 = vmatprep.subr.mxu0 0.0
        %1324 = vmatpush1.xpose.msra.mxu0 0.0
        %1325 = vmatprep.subr.mxu0 0.0
        %1326 = vmatpush1.xpose.msra.mxu0 0.0
        %1327 = vmatprep.subr.mxu0 0.0
        %1328 = vmatpush1.xpose.msra.mxu0 0.0
        %1329 = vmatprep.subr.mxu0 0.0
        %1330 = vmatpush1.xpose.msra.mxu0 0.0
        %1331 = vmatprep.subr.mxu0 0.0
        %1332 = vmatpush1.xpose.msra.mxu0 0.0
        %1333 = vmatprep.subr.mxu0 0.0
        %1334 = vmatpush1.xpose.msra.mxu0 0.0
        %1335 = vmatprep.subr.mxu0 0.0
        %1336 = vmatpush1.xpose.msra.mxu0 0.0
        %1337 = vmatprep.subr.mxu0 0.0
        %1338 = vmatpush1.xpose.msra.mxu0 0.0
        %1339 = vmatprep.subr.mxu0 0.0
        %1340 = vmatpush1.xpose.msra.mxu0 0.0
        %1341 = vmatprep.subr.mxu0 0.0
        %1342 = vmatpush1.xpose.msra.mxu0 0.0
        %1343 = vmatprep.subr.mxu0 0.0
        %1344 = vmatpush1.xpose.msra.mxu0 0.0
        %1345 = vmatprep.subr.mxu0 0.0
        %1346 = vmatpush1.xpose.msra.mxu0 0.0
        %1347 = vmatprep.subr.mxu0 0.0
        %1348 = vmatpush1.xpose.msra.mxu0 0.0
        %1349 = vmatprep.subr.mxu0 0.0
        %1350 = vmatpush1.xpose.msra.mxu0 0.0
        %1351 = vmatprep.subr.mxu0 0.0
        %1352 = vmatpush1.xpose.msra.mxu0 0.0
        %1353 = vmatprep.subr.mxu0 0.0
        %1354 = vmatpush1.xpose.msra.mxu0 0.0
        %1355 = vmatprep.subr.mxu0 0.0
        %1356 = vmatpush1.xpose.msra.mxu0 0.0
        %1357 = vmatprep.mubr.f32.mxu0 0.0
        %1358 = vmatmul.mubr.f32.gmra.mrb[0].mxu0 %v1289
        %v1359 = vpop.f32.mrb[0].mxu0
        %v1360 = vadd.f32 0.0, %v1359
        %v1361 = vpop.f32.mrb[0].mxu0
        %1362 = vdwg.mxu0
        %v1363 = vmul.f32 %v1360, 0.5
        %v1364 = vsel %vm338, %v1363, -inf
        %1365 = vmax.xlane.f32.xlu0 %v1364
        %v1366 = vpop.xlane.xlu0 %1365
        %v1367 = vsub.f32 %v1363, %v1366
        %v1368 = vmul.f32 %v1367, 1.442695
        %v1369 = vpow.pop %v1368
        %v1370 = vsel %vm338, %v1369, 0.0
        %1371 = vadd.xlane.f32.xlu0 %v1370
        %v1372 = vpop.xlane.xlu0 %1371
        %v1373 = vrcp.pop %v1372
        %v1374 = vmul.f32 %v1369, %v1373
        %1375 = vrot.lane.b32.xlu0 %v259, 104
        %v1376 = vpop.permute.xlu0 %1375
        %v1379 = vsel %vm338, %v1374, 0
        %1381 = vmatprep.subr.mxu0 0.0
        %1382 = vmatpush1.msra.mxu0 %v1376
        %1383 = vmatprep.subr.mxu0 0.0
        %1384 = vmatpush1.msra.mxu0 0.0
        %1385 = vmatprep.subr.mxu0 0.0
        %1386 = vmatpush1.msra.mxu0 0.0
        %1387 = vmatprep.subr.mxu0 0.0
        %1388 = vmatpush1.msra.mxu0 0.0
        %1389 = vmatprep.subr.mxu0 0.0
        %1390 = vmatpush1.msra.mxu0 0.0
        %1391 = vmatprep.subr.mxu0 0.0
        %1392 = vmatpush1.msra.mxu0 0.0
        %1393 = vmatprep.subr.mxu0 0.0
        %1394 = vmatpush1.msra.mxu0 0.0
        %1395 = vmatprep.subr.mxu0 0.0
        %1396 = vmatpush1.msra.mxu0 0.0
        %1397 = vmatprep.subr.mxu0 0.0
        %1398 = vmatpush1.msra.mxu0 0.0
        %1399 = vmatprep.subr.mxu0 0.0
        %1400 = vmatpush1.msra.mxu0 0.0
        %1401 = vmatprep.subr.mxu0 0.0
        %1402 = vmatpush1.msra.mxu0 0.0
        %1403 = vmatprep.subr.mxu0 0.0
        %1404 = vmatpush1.msra.mxu0 0.0
        %1405 = vmatprep.subr.mxu0 0.0
        %1406 = vmatpush1.msra.mxu0 0.0
        %1407 = vmatprep.subr.mxu0 0.0
        %1408 = vmatpush1.msra.mxu0 0.0
        %1409 = vmatprep.subr.mxu0 0.0
        %1410 = vmatpush1.msra.mxu0 0.0
        %1411 = vmatprep.subr.mxu0 0.0
        %1412 = vmatpush1.msra.mxu0 0.0
        %1413 = vmatprep.subr.mxu0 0.0
        %1414 = vmatpush1.msra.mxu0 0.0
        %1415 = vmatprep.subr.mxu0 0.0
        %1416 = vmatpush1.msra.mxu0 0.0
        %1417 = vmatprep.subr.mxu0 0.0
        %1418 = vmatpush1.msra.mxu0 0.0
        %1419 = vmatprep.subr.mxu0 0.0
        %1420 = vmatpush1.msra.mxu0 0.0
        %1421 = vmatprep.subr.mxu0 0.0
        %1422 = vmatpush1.msra.mxu0 0.0
        %1423 = vmatprep.subr.mxu0 0.0
        %1424 = vmatpush1.msra.mxu0 0.0
        %1425 = vmatprep.subr.mxu0 0.0
        %1426 = vmatpush1.msra.mxu0 0.0
        %1427 = vmatprep.subr.mxu0 0.0
        %1428 = vmatpush1.msra.mxu0 0.0
        %1429 = vmatprep.subr.mxu0 0.0
        %1430 = vmatpush1.msra.mxu0 0.0
        %1431 = vmatprep.subr.mxu0 0.0
        %1432 = vmatpush1.msra.mxu0 0.0
        %1433 = vmatprep.subr.mxu0 0.0
        %1434 = vmatpush1.msra.mxu0 0.0
        %1435 = vmatprep.subr.mxu0 0.0
        %1436 = vmatpush1.msra.mxu0 0.0
        %1437 = vmatprep.subr.mxu0 0.0
        %1438 = vmatpush1.msra.mxu0 0.0
        %1439 = vmatprep.subr.mxu0 0.0
        %1440 = vmatpush1.msra.mxu0 0.0
        %1441 = vmatprep.subr.mxu0 0.0
        %1442 = vmatpush1.msra.mxu0 0.0
        %1443 = vmatprep.subr.mxu0 0.0
        %1444 = vmatpush1.msra.mxu0 0.0
        %1445 = vmatprep.mubr.f32.mxu0 0.0
        %1446 = vmatmul.mubr.f32.gmra.mrb[0].mxu0 %v1379
        %v1447 = vpop.f32.mrb[0].mxu0
        %v1448 = vadd.f32 0.0, %v1447
        %v1449 = vpop.f32.mrb[0].mxu0
        %1450 = vdwg.mxu0
        %1452 = vrot.lane.b32.xlu0 %v1448, 24
        %v1453 = vpop.permute.xlu0 %1452
        %vm1455 = vcmask 228544
        %1456 = vst.msk [vmem:[%s256] sm:$0xff] %vm1455, %v1453
        %1457 = vrot.lane.b32.xlu0 %v257, 100
        %v1458 = vpop.permute.xlu0 %1457
        %1459 = vrot.lane.b32.xlu0 %v258, 100
        %v1460 = vpop.permute.xlu0 %1459
        %v1461 = vsel %vm260, %v1458, 0
        %v1463 = vsel %vm260, %v1460, 0
        %1465 = vmatprep.subr.mxu0 0.0
        %1466 = vmatpush1.xpose.msra.mxu0 %v1463
        %1467 = vmatprep.subr.mxu0 0.0
        %1468 = vmatpush1.xpose.msra.mxu0 0.0
        %1469 = vmatprep.subr.mxu0 0.0
        %1470 = vmatpush1.xpose.msra.mxu0 0.0
        %1471 = vmatprep.subr.mxu0 0.0
        %1472 = vmatpush1.xpose.msra.mxu0 0.0
        %1473 = vmatprep.subr.mxu0 0.0
        %1474 = vmatpush1.xpose.msra.mxu0 0.0
        %1475 = vmatprep.subr.mxu0 0.0
        %1476 = vmatpush1.xpose.msra.mxu0 0.0
        %1477 = vmatprep.subr.mxu0 0.0
        %1478 = vmatpush1.xpose.msra.mxu0 0.0
        %1479 = vmatprep.subr.mxu0 0.0
        %1480 = vmatpush1.xpose.msra.mxu0 0.0
        %1481 = vmatprep.subr.mxu0 0.0
        %1482 = vmatpush1.xpose.msra.mxu0 0.0
        %1483 = vmatprep.subr.mxu0 0.0
        %1484 = vmatpush1.xpose.msra.mxu0 0.0
        %1485 = vmatprep.subr.mxu0 0.0
        %1486 = vmatpush1.xpose.msra.mxu0 0.0
        %1487 = vmatprep.subr.mxu0 0.0
        %1488 = vmatpush1.xpose.msra.mxu0 0.0
        %1489 = vmatprep.subr.mxu0 0.0
        %1490 = vmatpush1.xpose.msra.mxu0 0.0
        %1491 = vmatprep.subr.mxu0 0.0
        %1492 = vmatpush1.xpose.msra.mxu0 0.0
        %1493 = vmatprep.subr.mxu0 0.0
        %1494 = vmatpush1.xpose.msra.mxu0 0.0
        %1495 = vmatprep.subr.mxu0 0.0
        %1496 = vmatpush1.xpose.msra.mxu0 0.0
        %1497 = vmatprep.subr.mxu0 0.0
        %1498 = vmatpush1.xpose.msra.mxu0 0.0
        %1499 = vmatprep.subr.mxu0 0.0
        %1500 = vmatpush1.xpose.msra.mxu0 0.0
        %1501 = vmatprep.subr.mxu0 0.0
        %1502 = vmatpush1.xpose.msra.mxu0 0.0
        %1503 = vmatprep.subr.mxu0 0.0
        %1504 = vmatpush1.xpose.msra.mxu0 0.0
        %1505 = vmatprep.subr.mxu0 0.0
        %1506 = vmatpush1.xpose.msra.mxu0 0.0
        %1507 = vmatprep.subr.mxu0 0.0
        %1508 = vmatpush1.xpose.msra.mxu0 0.0
        %1509 = vmatprep.subr.mxu0 0.0
        %1510 = vmatpush1.xpose.msra.mxu0 0.0
        %1511 = vmatprep.subr.mxu0 0.0
        %1512 = vmatpush1.xpose.msra.mxu0 0.0
        %1513 = vmatprep.subr.mxu0 0.0
        %1514 = vmatpush1.xpose.msra.mxu0 0.0
        %1515 = vmatprep.subr.mxu0 0.0
        %1516 = vmatpush1.xpose.msra.mxu0 0.0
        %1517 = vmatprep.subr.mxu0 0.0
        %1518 = vmatpush1.xpose.msra.mxu0 0.0
        %1519 = vmatprep.subr.mxu0 0.0
        %1520 = vmatpush1.xpose.msra.mxu0 0.0
        %1521 = vmatprep.subr.mxu0 0.0
        %1522 = vmatpush1.xpose.msra.mxu0 0.0
        %1523 = vmatprep.subr.mxu0 0.0
        %1524 = vmatpush1.xpose.msra.mxu0 0.0
        %1525 = vmatprep.subr.mxu0 0.0
        %1526 = vmatpush1.xpose.msra.mxu0 0.0
        %1527 = vmatprep.subr.mxu0 0.0
        %1528 = vmatpush1.xpose.msra.mxu0 0.0
        %1529 = vmatprep.mubr.f32.mxu0 0.0
        %1530 = vmatmul.mubr.f32.gmra.mrb[0].mxu0 %v1461
        %v1531 = vpop.f32.mrb[0].mxu0
        %v1532 = vadd.f32 0.0, %v1531
        %v1533 = vpop.f32.mrb[0].mxu0
        %1534 = vdwg.mxu0
        %v1535 = vmul.f32 %v1532, 0.5
        %v1536 = vsel %vm338, %v1535, -inf
        %1537 = vmax.xlane.f32.xlu0 %v1536
        %v1538 = vpop.xlane.xlu0 %1537
        %v1539 = vsub.f32 %v1535, %v1538
        %v1540 = vmul.f32 %v1539, 1.442695
        %v1541 = vpow.pop %v1540
        %v1542 = vsel %vm338, %v1541, 0.0
        %1543 = vadd.xlane.f32.xlu0 %v1542
        %v1544 = vpop.xlane.xlu0 %1543
        %v1545 = vrcp.pop %v1544
        %v1546 = vmul.f32 %v1541, %v1545
        %1547 = vrot.lane.b32.xlu0 %v259, 100
        %v1548 = vpop.permute.xlu0 %1547
        %v1551 = vsel %vm338, %v1546, 0
        %1553 = vmatprep.subr.mxu0 0.0
        %1554 = vmatpush1.msra.mxu0 %v1548
        %1555 = vmatprep.subr.mxu0 0.0
        %1556 = vmatpush1.msra.mxu0 0.0
        %1557 = vmatprep.subr.mxu0 0.0
        %1558 = vmatpush1.msra.mxu0 0.0
        %1559 = vmatprep.subr.mxu0 0.0
        %1560 = vmatpush1.msra.mxu0 0.0
        %1561 = vmatprep.subr.mxu0 0.0
        %1562 = vmatpush1.msra.mxu0 0.0
        %1563 = vmatprep.subr.mxu0 0.0
        %1564 = vmatpush1.msra.mxu0 0.0
        %1565 = vmatprep.subr.mxu0 0.0
        %1566 = vmatpush1.msra.mxu0 0.0
        %1567 = vmatprep.subr.mxu0 0.0
        %1568 = vmatpush1.msra.mxu0 0.0
        %1569 = vmatprep.subr.mxu0 0.0
        %1570 = vmatpush1.msra.mxu0 0.0
        %1571 = vmatprep.subr.mxu0 0.0
        %1572 = vmatpush1.msra.mxu0 0.0
        %1573 = vmatprep.subr.mxu0 0.0
        %1574 = vmatpush1.msra.mxu0 0.0
        %1575 = vmatprep.subr.mxu0 0.0
        %1576 = vmatpush1.msra.mxu0 0.0
        %1577 = vmatprep.subr.mxu0 0.0
        %1578 = vmatpush1.msra.mxu0 0.0
        %1579 = vmatprep.subr.mxu0 0.0
        %1580 = vmatpush1.msra.mxu0 0.0
        %1581 = vmatprep.subr.mxu0 0.0
        %1582 = vmatpush1.msra.mxu0 0.0
        %1583 = vmatprep.subr.mxu0 0.0
        %1584 = vmatpush1.msra.mxu0 0.0
        %1585 = vmatprep.subr.mxu0 0.0
        %1586 = vmatpush1.msra.mxu0 0.0
        %1587 = vmatprep.subr.mxu0 0.0
        %1588 = vmatpush1.msra.mxu0 0.0
        %1589 = vmatprep.subr.mxu0 0.0
        %1590 = vmatpush1.msra.mxu0 0.0
        %1591 = vmatprep.subr.mxu0 0.0
        %1592 = vmatpush1.msra.mxu0 0.0
        %1593 = vmatprep.subr.mxu0 0.0
        %1594 = vmatpush1.msra.mxu0 0.0
        %1595 = vmatprep.subr.mxu0 0.0
        %1596 = vmatpush1.msra.mxu0 0.0
        %1597 = vmatprep.subr.mxu0 0.0
        %1598 = vmatpush1.msra.mxu0 0.0
        %1599 = vmatprep.subr.mxu0 0.0
        %1600 = vmatpush1.msra.mxu0 0.0
        %1601 = vmatprep.subr.mxu0 0.0
        %1602 = vmatpush1.msra.mxu0 0.0
        %1603 = vmatprep.subr.mxu0 0.0
        %1604 = vmatpush1.msra.mxu0 0.0
        %1605 = vmatprep.subr.mxu0 0.0
        %1606 = vmatpush1.msra.mxu0 0.0
        %1607 = vmatprep.subr.mxu0 0.0
        %1608 = vmatpush1.msra.mxu0 0.0
        %1609 = vmatprep.subr.mxu0 0.0
        %1610 = vmatpush1.msra.mxu0 0.0
        %1611 = vmatprep.subr.mxu0 0.0
        %1612 = vmatpush1.msra.mxu0 0.0
        %1613 = vmatprep.subr.mxu0 0.0
        %1614 = vmatpush1.msra.mxu0 0.0
        %1615 = vmatprep.subr.mxu0 0.0
        %1616 = vmatpush1.msra.mxu0 0.0
        %1617 = vmatprep.mubr.f32.mxu0 0.0
        %1618 = vmatmul.mubr.f32.gmra.mrb[0].mxu0 %v1551
        %v1619 = vpop.f32.mrb[0].mxu0
        %v1620 = vadd.f32 0.0, %v1619
        %v1621 = vpop.f32.mrb[0].mxu0
        %1622 = vdwg.mxu0
        %1624 = vrot.lane.b32.xlu0 %v1620, 28
        %v1625 = vpop.permute.xlu0 %1624
        %vm1627 = vcmask 261344
        %1628 = vst.msk [vmem:[%s256] sm:$0xff] %vm1627, %v1625
        %s1629 = sand.u32 %s109, 1
        %s1630 = scalar_lea.sflag [#allocation4], %s1629
        %s1631 = sand.u32 %s109, 1
        %s1632 = smul.addr %s1631, 8
        %s1633 = scalar_lea.vmem [#allocation8], %s1632
        // Predicated region
        $region45: #{tpu_custom_call.1} parent=31 // pred_check
          %p1634 = pneg %p119
        $region46: #{tpu_custom_call.1} parent=31 // pred_check_branch
          %1636 = sbr.rel (%p1634) target = $region48
        $region47: #{tpu_custom_call.1} parent=31 // pred_region
          %s1638 = ssub.s32 128, 128
          %1639 = vsyncadd %s1630, %s1638
          %s1640 = smul.addr %s23, 128
          %s1641 = scalar_lea.hbm %s3, %s1640
          %s1643 = sshll.u32 %s1633, 4
          %s1644 = int_to_ptr.vmem [resolvable:$true] %s1643
          %1646 = dma.vmem_to_hbm [thread:$0]  %s1644, 128, %s1641, %s1630
        $region48: #{tpu_custom_call.1} parent=31 // pred_fallthru
          _
      $region32: #{tpu_custom_call.1} parent=5 // pred_fallthru
        _
      %p1647 = scmp.le.s32.totalorder 2, %s18
      // Predicated region
      $region49: #{tpu_custom_call.1} parent=5 // pred_check
        %p1648 = pneg %p1647
      $region50: #{tpu_custom_call.1} parent=5 // pred_check_branch
        %1650 = sbr.rel (%p1648) target = $region52
      $region51: #{tpu_custom_call.1} parent=5 // pred_region
        %s1651 = ssub.s32 %s18, 2
        // Predicated region
        $region53: #{tpu_custom_call.1} parent=51 // pred_check
          %p1652 = pneg %p125
        $region54: #{tpu_custom_call.1} parent=51 // pred_check_branch
          %1654 = sbr.rel (%p1652) target = $region56
        $region55: #{tpu_custom_call.1} parent=51 // pred_region
          %s1655 = sand.u32 %s110, 1
          %s1656 = scalar_lea.sflag [#allocation4], %s1655
          %s1657 = sand.u32 %s110, 1
          %s1658 = smul.addr %s1657, 8
          %s1659 = scalar_lea.vmem [#allocation8], %s1658
          %1660 = dma.done %s1656, 128
        $region56: #{tpu_custom_call.1} parent=51 // pred_fallthru
          _
      $region52: #{tpu_custom_call.1} parent=5 // pred_fallthru
        _
    $region6: #{tpu_custom_call.1} parent=1 // loop_footer
      %s22 = sadd.s32 1, %s18
    $region7: #{tpu_custom_call.1} parent=1 // loop_footer_branch
      %17 = sbr.rel target = $region3
    $region8: #{tpu_custom_call.1} parent=1 // loop_exit
      _
    %1661 = vsyncpa [#allocation3], 1
    %s1662 = scalar_lea.sflag [#allocation3], 1
    %1663 = vsyncpa %s1662, 1
    %1664 = vsyncpa [#allocation6], 1
    %s1665 = scalar_lea.sflag [#allocation6], 1
    %1666 = vsyncpa %s1665, 1
    %1667 = vsyncpa [#allocation4], 1
    %s1668 = scalar_lea.sflag [#allocation4], 1
    %1669 = vsyncpa %s1668, 1

</llo_original>
